<compile_context>
chip_gen: v7x
topology: tpu7x:2x2x1
jax: 0.10.0
libtpu: 0.0.40
codegen_flags: <defaults>
</compile_context>

<pallas_src>
import functools

import jax
import jax.numpy as jnp
from jax.experimental import pallas as pl
from jax.experimental.pallas import tpu as pltpu

_LN_EPS = 1e-5


def _round_up(n, m):
    return ((n + m - 1) // m) * m


def _vmem_capacity_bytes():
    try:
        cap = int(pltpu.get_tpu_info().vmem_capacity_bytes)
        if cap > 0:
            return cap
    except Exception:
        pass
    return 64 * 1024 * 1024  # conservative: v7x per-TensorCore VMEM


def _resident_need_bytes(tile_n, e_pad, e_out, x_item, out_item):
    weights = 2 * e_pad * e_pad * 2          # two bf16 weights, single-buffered
    vectors = 4 * e_pad * 4
    x_blk = 2 * tile_n * e_pad * x_item      # double-buffered input blocks
    o_blk = 2 * tile_n * e_out * out_item    # double-buffered output blocks
    interm = 14 * tile_n * e_pad             # h / relu / y / z live values
    return weights + vectors + x_blk + o_blk + interm


def _stream_need_bytes(tile_n, e, tk, x_item, out_item):
    x_blk = 2 * tile_n * e * x_item
    w_blk = 2 * (e * tk + tk * e) * 2        # double-buffered W1/W2 K-tiles (bf16)
    vecs = 2 * tk * 4 + 3 * e * 4
    o_blk = 2 * tile_n * e * out_item
    scratch = 2 * tile_n * e * 4             # h scratch + y scratch (f32)
    interm = 12 * tile_n * tk
    return x_blk + w_blk + vecs + o_blk + scratch + interm


# ---------------------------------------------------------------------------
# Kernels
# ---------------------------------------------------------------------------
def _make_resident_kernel(e_true, e_pad):
    inv_e = 1.0 / float(e_true)

    def kernel(x_ref, w1_ref, b1_ref, w2_ref, b2_ref, g_ref, beta_ref, o_ref):
        x = x_ref[...].astype(jnp.bfloat16)
        # MXU matmuls in bf16 with f32 accumulation.
        h = jnp.dot(x, w1_ref[...], preferred_element_type=jnp.float32) + b1_ref[...]
        # TODO(synk): dropout is identity for p=0.0 / eval; training-mode dropout not implemented.
        r = jnp.maximum(h, 0.0).astype(jnp.bfloat16)
        y = jnp.dot(r, w2_ref[...], preferred_element_type=jnp.float32) + b2_ref[...]
        # Residual uses the linear1 output (the module reassigns x = linear1(x) before the skip).
        z = h + y                                   # padded lanes are exactly 0
        mean = jnp.sum(z, axis=-1, keepdims=True) * inv_e
        d = z - mean
        if e_pad != e_true:                          # mask padded lanes for the 2-pass variance
            lane = jax.lax.broadcasted_iota(jnp.int32, z.shape, 1)
            d = jnp.where(lane < e_true, d, 0.0)
        var = jnp.sum(d * d, axis=-1, keepdims=True) * inv_e
        inv = jax.lax.rsqrt(var + _LN_EPS)
        out = d * inv * g_ref[...] + beta_ref[...]
        o_ref[...] = out[:, : o_ref.shape[-1]].astype(o_ref.dtype)

    return kernel


def _make_stream_kernel(e_true, num_k, tk):
    inv_e = 1.0 / float(e_true)

    def kernel(x_ref, w1_ref, b1_ref, w2_ref, b2_ref, g_ref, beta_ref, o_ref, h_sc, y_sc):
        k = pl.program_id(1)

        @pl.when(k == 0)
        def _():
            y_sc[...] = jnp.zeros_like(y_sc)

        x = x_ref[...].astype(jnp.bfloat16)
        hk = jnp.dot(x, w1_ref[...], preferred_element_type=jnp.float32) + b1_ref[...]
        h_sc[k] = hk                                            # keep linear1 out for the residual
        rk = jnp.maximum(hk, 0.0).astype(jnp.bfloat16)
        y_sc[...] += jnp.dot(rk, w2_ref[...], preferred_element_type=jnp.float32)

        @pl.when(k == num_k - 1)
        def _():
            b2 = b2_ref[...]
            g = g_ref[...]
            beta = beta_ref[...]
            rows = x_ref.shape[0]

            def sl_of(kk):
                return slice(kk * tk, (kk + 1) * tk)

            def z_tile(kk):
                sl = sl_of(kk)
                return h_sc[kk] + y_sc[:, sl] + b2[:, sl]

            # Two-pass LayerNorm over the streamed z, in static tk-wide lane slices.
            s = jnp.zeros((rows, 1), jnp.float32)
            for kk in range(num_k):
                s = s + jnp.sum(z_tile(kk), axis=-1, keepdims=True)
            mean = s * inv_e

            v = jnp.zeros((rows, 1), jnp.float32)
            for kk in range(num_k):
                dk = z_tile(kk) - mean
                v = v + jnp.sum(dk * dk, axis=-1, keepdims=True)
            inv = jax.lax.rsqrt(v * inv_e + _LN_EPS)

            for kk in range(num_k):
                sl = sl_of(kk)
                o_ref[:, sl] = ((z_tile(kk) - mean) * inv * g[:, sl]
                                + beta[:, sl]).astype(o_ref.dtype)

    return kernel


# ---------------------------------------------------------------------------
# pallas_call wrapper
# ---------------------------------------------------------------------------
@functools.partial(
    jax.jit,
    static_argnames=("tile_n", "tk", "use_stream", "vmem_limit", "bf16_out", "single_buffer"),
)
def _feed_forward_impl(x, w1, b1, w2, b2, gamma, beta, *, tile_n, tk, use_stream,
                       vmem_limit, bf16_out, single_buffer):
    B, S, E = x.shape
    N = B * S
    f32, bf16 = jnp.float32, jnp.bfloat16
    out_dtype = bf16 if bf16_out else x.dtype

    aligned = (E % 128 == 0)
    e_pad = E if aligned else _round_up(max(E, 128), 128)
    num_row_tiles = pl.cdiv(N, tile_n)

    # Parameters: PyTorch (out, in) -> (in, out), bf16 for the MXU (folded under jit).
    w1t = jnp.asarray(w1, f32).T.astype(bf16)
    w2t = jnp.asarray(w2, f32).T.astype(bf16)
    b1v = jnp.asarray(b1, f32).reshape(1, E)
    b2v = jnp.asarray(b2, f32).reshape(1, E)
    gv = jnp.asarray(gamma, f32).reshape(1, E)
    bv = jnp.asarray(beta, f32).reshape(1, E)

    if aligned:
        x2 = x.reshape(N, E)                 # no padded copy; cast to bf16 inside the kernel
        w1p, w2p, b1p, b2p, gp, bp = w1t, w2t, b1v, b2v, gv, bv
    else:
        pad = e_pad - E
        x2 = jnp.pad(x.reshape(N, E).astype(bf16), ((0, 0), (0, pad)))
        w1p = jnp.pad(w1t, ((0, pad), (0, pad)))
        w2p = jnp.pad(w2t, ((0, pad), (0, pad)))
        b1p = jnp.pad(b1v, ((0, 0), (0, pad)))
        b2p = jnp.pad(b2v, ((0, 0), (0, pad)))
        gp = jnp.pad(gv, ((0, 0), (0, pad)))
        bp = jnp.pad(bv, ((0, 0), (0, pad)))

    cost = pl.CostEstimate(
        flops=4 * N * e_pad * e_pad,
        transcendentals=N,
        bytes_accessed=(x2.size * x2.dtype.itemsize + 2 * e_pad * e_pad * 2
                        + N * E * jnp.dtype(out_dtype).itemsize),
    )

    def inv_spec(shape, index_map):
        # Grid-invariant operand: single-buffered so weights are resident exactly once.
        if single_buffer:
            return pl.BlockSpec(shape, index_map, pipeline_mode=pl.Buffered(1))
        return pl.BlockSpec(shape, index_map)

    if not use_stream:
        in_specs = [
            pl.BlockSpec((tile_n, e_pad), lambda i: (i, 0)),
            inv_spec((e_pad, e_pad), lambda i: (0, 0)),
            inv_spec((1, e_pad), lambda i: (0, 0)),
            inv_spec((e_pad, e_pad), lambda i: (0, 0)),
            inv_spec((1, e_pad), lambda i: (0, 0)),
            inv_spec((1, e_pad), lambda i: (0, 0)),
            inv_spec((1, e_pad), lambda i: (0, 0)),
        ]
        out = pl.pallas_call(
            _make_resident_kernel(E, e_pad),
            out_shape=jax.ShapeDtypeStruct((N, E), out_dtype),
            grid=(num_row_tiles,),
            in_specs=in_specs,
            out_specs=pl.BlockSpec((tile_n, E), lambda i: (i, 0)),
            compiler_params=pltpu.CompilerParams(
                dimension_semantics=("parallel",),
                vmem_limit_bytes=vmem_limit,
            ),
            cost_estimate=cost,
        )(x2, w1p, b1p, w2p, b2p, gp, bp)
    else:
        num_k = E // tk
        in_specs = [
            pl.BlockSpec((tile_n, E), lambda i, k: (i, 0)),
            pl.BlockSpec((E, tk), lambda i, k: (0, k)),        # W1 column tile
            pl.BlockSpec((1, tk), lambda i, k: (0, k)),        # b1 tile
            pl.BlockSpec((tk, E), lambda i, k: (k, 0)),        # W2 row tile
            inv_spec((1, E), lambda i, k: (0, 0)),
            inv_spec((1, E), lambda i, k: (0, 0)),
            inv_spec((1, E), lambda i, k: (0, 0)),
        ]
        out = pl.pallas_call(
            _make_stream_kernel(E, num_k, tk),
            out_shape=jax.ShapeDtypeStruct((N, E), out_dtype),
            grid=(num_row_tiles, num_k),
            in_specs=in_specs,
            out_specs=pl.BlockSpec((tile_n, E), lambda i, k: (i, 0)),
            scratch_shapes=[
                pltpu.VMEM((num_k, tile_n, tk), jnp.float32),  # linear1 output (residual)
                pltpu.VMEM((tile_n, E), jnp.float32),          # linear2 accumulator
            ],
            compiler_params=pltpu.CompilerParams(
                dimension_semantics=("parallel", "arbitrary"),
                vmem_limit_bytes=vmem_limit,
            ),
            cost_estimate=cost,
        )(x2, w1p, b1p, w2p, b2p, gp, bp)

    return out.reshape(B, S, E)


def feed_forward(x, w1, b1, w2, b2, gamma, beta, *, tile_n=512, tk=None,
                 bf16_out=False, force_stream=False):
    """x: (B, S, E); w1, w2: PyTorch-style (out, in); b1, b2, gamma, beta: (E,)."""
    B, S, E = x.shape
    N = B * S
    aligned = (E % 128 == 0)
    e_pad = E if aligned else _round_up(max(E, 128), 128)

    x_item = jnp.dtype(x.dtype).itemsize if aligned else 2       # bf16 when lane-padded
    out_item = 2 if bf16_out else jnp.dtype(x.dtype).itemsize

    budget = (_vmem_capacity_bytes() * 7) // 8                   # per-TensorCore headroom

    tile_n = max(128, _round_up(int(tile_n), 128))                # MXU-friendly row tile
    tile_n = min(tile_n, _round_up(N, 128))                       # partial last block is fine

    # Two resident bf16 weights; stream the hidden dim when they would dominate VMEM
    # (v7x: 64 MiB/TC => transformer-sized E must stream).
    weight_bytes = 2 * e_pad * e_pad * 2
    use_stream = aligned and (force_stream or weight_bytes > (budget * 3) // 5)

    if use_stream:
        tk_cands = [t for t in (512, 256, 128) if t <= E and E % t == 0] or [128]
        if tk is not None and E % int(tk) == 0 and int(tk) % 128 == 0:
            tk_cands = [int(tk)]
        tn_cands = []
        for t in (tile_n, 256, 128):
            if 128 <= t <= tile_n and t not in tn_cands:
                tn_cands.append(t)
        chosen = None
        for tn_c in tn_cands:
            for tk_c in tk_cands:
                if _stream_need_bytes(tn_c, E, tk_c, x_item, out_item) <= budget:
                    chosen = (tn_c, tk_c)
                    break
            if chosen is not None:
                break
        if chosen is None:
            chosen = (128, tk_cands[-1])
        tile_n, tk = chosen
        need = _stream_need_bytes(tile_n, E, tk, x_item, out_item)
    else:
        tk = 128                                                  # unused in the resident path
        while tile_n > 128 and _resident_need_bytes(tile_n, e_pad, E, x_item, out_item) > budget:
            tile_n = max(128, _round_up(tile_n // 2, 128))
        need = _resident_need_bytes(tile_n, e_pad, E, x_item, out_item)

    vmem_limit = int(min(budget, max(need * 3 // 2, 32 * 1024 * 1024)))

    kwargs = dict(tile_n=int(tile_n), tk=int(tk), use_stream=bool(use_stream),
                  vmem_limit=vmem_limit, bf16_out=bool(bf16_out))
    try:
        return _feed_forward_impl(x, w1, b1, w2, b2, gamma, beta, single_buffer=True, **kwargs)
    except Exception:
        # Fallback for jax versions without BlockSpec(pipeline_mode=pl.Buffered(1)).
        return _feed_forward_impl(x, w1, b1, w2, b2, gamma, beta, single_buffer=False, **kwargs)


# ---------------------------------------------------------------------------
# Reference & self-test
# ---------------------------------------------------------------------------
def _reference(x, w1, b1, w2, b2, gamma, beta):
    h = jnp.einsum("bse,oe->bso", x, w1) + b1
    y = jnp.einsum("bse,oe->bso", jnp.maximum(h, 0.0), w2) + b2
    z = h + y
    mean = jnp.mean(z, axis=-1, keepdims=True)
    var = jnp.mean((z - mean) ** 2, axis=-1, keepdims=True)
    return (z - mean) * jax.lax.rsqrt(var + _LN_EPS) * gamma + beta


def _run_case(embed_dim, *, batch=2, seq=8, force_stream=False, tile_n=512, tk=None):
    key = jax.random.PRNGKey(0)
    kx, k1, k2, k3, k4 = jax.random.split(key, 5)
    x = jax.random.normal(kx, (batch, seq, embed_dim), dtype=jnp.float32)
    bound = 1.0 / (embed_dim ** 0.5)
    w1 = jax.random.uniform(k1, (embed_dim, embed_dim), minval=-bound, maxval=bound,
                            dtype=jnp.float32)
    b1 = jax.random.uniform(k2, (embed_dim,), minval=-bound, maxval=bound, dtype=jnp.float32)
    w2 = jax.random.uniform(k3, (embed_dim, embed_dim), minval=-bound, maxval=bound,
                            dtype=jnp.float32)
    b2 = jax.random.uniform(k4, (embed_dim,), minval=-bound, maxval=bound, dtype=jnp.float32)
    gamma = jnp.ones((embed_dim,), jnp.float32)
    beta = jnp.zeros((embed_dim,), jnp.float32)

    out = feed_forward(x, w1, b1, w2, b2, gamma, beta, tile_n=tile_n, tk=tk,
                       force_stream=force_stream)
    out = jax.block_until_ready(out)
    ref = _reference(x, w1, b1, w2, b2, gamma, beta)
    assert out.shape == x.shape
    # bf16 MXU matmuls with f32 accumulation -> loosened tolerance vs the f32 reference.
    assert jnp.allclose(out, ref, atol=5e-2, rtol=5e-2), float(jnp.max(jnp.abs(out - ref)))


if __name__ == "__main__":
    _run_case(32)                                  # E not 128-aligned: lane-padded, true-E output block
    _run_case(128)                                 # 128-aligned fast path: no padding, no output slice
    _run_case(256, force_stream=True, tk=128)      # hidden-dim streaming path (v7x / large-E)
    print("KERNEL_OK")
</pallas_src>

<mosaic_0001>
module attributes {stable_mosaic.version = 11 : i64} {
  func.func @kernel(%arg0: i32, %arg1: memref<128x128xbf16, #tpu.memory_space<vmem>>, %arg2: memref<128x128xbf16, #tpu.memory_space<vmem>>, %arg3: memref<1x128xf32, #tpu.memory_space<vmem>>, %arg4: memref<128x128xbf16, #tpu.memory_space<vmem>>, %arg5: memref<1x128xf32, #tpu.memory_space<vmem>>, %arg6: memref<1x128xf32, #tpu.memory_space<vmem>>, %arg7: memref<1x128xf32, #tpu.memory_space<vmem>>, %arg8: memref<128x32xf32, #tpu.memory_space<vmem>>) attributes {dimension_semantics = [#tpu.dimension_semantics<parallel>], iteration_bounds = array<i64: 1>, scalar_prefetch = 0 : i64, scratch_operands = 0 : i64, tpu.core_type = #tpu.core_type<tc>, window_params = [{transform_indices = @transform_0, window_bounds = array<i64: 128, 128>}, {pipeline_mode = #tpu.pipeline_mode<synchronous>, transform_indices = @transform_1, window_bounds = array<i64: 128, 128>}, {pipeline_mode = #tpu.pipeline_mode<synchronous>, transform_indices = @transform_2, window_bounds = array<i64: 1, 128>}, {pipeline_mode = #tpu.pipeline_mode<synchronous>, transform_indices = @transform_3, window_bounds = array<i64: 128, 128>}, {pipeline_mode = #tpu.pipeline_mode<synchronous>, transform_indices = @transform_4, window_bounds = array<i64: 1, 128>}, {pipeline_mode = #tpu.pipeline_mode<synchronous>, transform_indices = @transform_5, window_bounds = array<i64: 1, 128>}, {pipeline_mode = #tpu.pipeline_mode<synchronous>, transform_indices = @transform_6, window_bounds = array<i64: 1, 128>}, {transform_indices = @transform_7, window_bounds = array<i64: 128, 32>}]} {
    %c0 = arith.constant 0 : index
    %c0_0 = arith.constant 0 : index
    %0 = vector.load %arg1[%c0, %c0_0] : memref<128x128xbf16, #tpu.memory_space<vmem>>, vector<128x128xbf16>
    %c0_1 = arith.constant 0 : index
    %c0_2 = arith.constant 0 : index
    %1 = vector.load %arg2[%c0_1, %c0_2] : memref<128x128xbf16, #tpu.memory_space<vmem>>, vector<128x128xbf16>
    %cst = arith.constant dense<0.000000e+00> : vector<128x128xf32>
    %2 = tpu.matmul %0, %1, %cst {dimension_numbers = #tpu.dot_dimension_numbers<[1], [0], [0], [1], [0, 0, 1, 1], [], []>} : vector<128x128xbf16>, vector<128x128xbf16>, vector<128x128xf32> -> vector<128x128xf32>
    %c0_3 = arith.constant 0 : index
    %c0_4 = arith.constant 0 : index
    %3 = vector.load %arg3[%c0_3, %c0_4] : memref<1x128xf32, #tpu.memory_space<vmem>>, vector<1x128xf32>
    %4 = vector.broadcast %3 : vector<1x128xf32> to vector<128x128xf32>
    %5 = arith.addf %2, %4 : vector<128x128xf32>
    %cst_5 = arith.constant 0.000000e+00 : f32
    %6 = vector.broadcast %cst_5 : f32 to vector<128x128xf32>
    %7 = arith.maximumf %5, %6 : vector<128x128xf32>
    %8 = arith.truncf %7 : vector<128x128xf32> to vector<128x128xbf16>
    %c0_6 = arith.constant 0 : index
    %c0_7 = arith.constant 0 : index
    %9 = vector.load %arg4[%c0_6, %c0_7] : memref<128x128xbf16, #tpu.memory_space<vmem>>, vector<128x128xbf16>
    %cst_8 = arith.constant dense<0.000000e+00> : vector<128x128xf32>
    %10 = tpu.matmul %8, %9, %cst_8 {dimension_numbers = #tpu.dot_dimension_numbers<[1], [0], [0], [1], [0, 0, 1, 1], [], []>} : vector<128x128xbf16>, vector<128x128xbf16>, vector<128x128xf32> -> vector<128x128xf32>
    %c0_9 = arith.constant 0 : index
    %c0_10 = arith.constant 0 : index
    %11 = vector.load %arg5[%c0_9, %c0_10] : memref<1x128xf32, #tpu.memory_space<vmem>>, vector<1x128xf32>
    %12 = vector.broadcast %11 : vector<1x128xf32> to vector<128x128xf32>
    %13 = arith.addf %10, %12 : vector<128x128xf32>
    %14 = arith.addf %5, %13 : vector<128x128xf32>
    %cst_11 = arith.constant dense<0.000000e+00> : vector<128xf32>
    %15 = vector.multi_reduction <add>, %14, %cst_11 [1] : vector<128x128xf32> to vector<128xf32>
    %16 = vector.shape_cast %15 : vector<128xf32> to vector<128x1xf32>
    %cst_12 = arith.constant 3.125000e-02 : f32
    %17 = vector.broadcast %cst_12 : f32 to vector<128x1xf32>
    %18 = arith.mulf %16, %17 : vector<128x1xf32>
    %19 = vector.broadcast %18 : vector<128x1xf32> to vector<128x128xf32>
    %20 = arith.subf %14, %19 : vector<128x128xf32>
    %21 = tpu.iota {dimensions = array<i32: 1>} : vector<128x128xi32>
    %c32_i32 = arith.constant 32 : i32
    %22 = vector.broadcast %c32_i32 : i32 to vector<128x128xi32>
    %23 = arith.cmpi slt, %21, %22 : vector<128x128xi32>
    %cst_13 = arith.constant 0.000000e+00 : f32
    %24 = vector.broadcast %cst_13 : f32 to vector<128x128xf32>
    %25 = arith.select %23, %20, %24 : vector<128x128xi1>, vector<128x128xf32>
    %26 = arith.mulf %25, %25 : vector<128x128xf32>
    %cst_14 = arith.constant dense<0.000000e+00> : vector<128xf32>
    %27 = vector.multi_reduction <add>, %26, %cst_14 [1] : vector<128x128xf32> to vector<128xf32>
    %28 = vector.shape_cast %27 : vector<128xf32> to vector<128x1xf32>
    %cst_15 = arith.constant 3.125000e-02 : f32
    %29 = vector.broadcast %cst_15 : f32 to vector<128x1xf32>
    %30 = arith.mulf %28, %29 : vector<128x1xf32>
    %cst_16 = arith.constant 9.99999974E-6 : f32
    %31 = vector.broadcast %cst_16 : f32 to vector<128x1xf32>
    %32 = arith.addf %30, %31 : vector<128x1xf32>
    %33 = math.rsqrt %32 : vector<128x1xf32>
    %34 = vector.broadcast %33 : vector<128x1xf32> to vector<128x128xf32>
    %35 = arith.mulf %25, %34 : vector<128x128xf32>
    %c0_17 = arith.constant 0 : index
    %c0_18 = arith.constant 0 : index
    %36 = vector.load %arg6[%c0_17, %c0_18] : memref<1x128xf32, #tpu.memory_space<vmem>>, vector<1x128xf32>
    %37 = vector.broadcast %36 : vector<1x128xf32> to vector<128x128xf32>
    %38 = arith.mulf %35, %37 : vector<128x128xf32>
    %c0_19 = arith.constant 0 : index
    %c0_20 = arith.constant 0 : index
    %39 = vector.load %arg7[%c0_19, %c0_20] : memref<1x128xf32, #tpu.memory_space<vmem>>, vector<1x128xf32>
    %40 = vector.broadcast %39 : vector<1x128xf32> to vector<128x128xf32>
    %41 = arith.addf %38, %40 : vector<128x128xf32>
    %42 = vector.extract_strided_slice %41 {offsets = [0, 0], sizes = [128, 32], strides = [1, 1]} : vector<128x128xf32> to vector<128x32xf32>
    %c0_21 = arith.constant 0 : index
    %c0_22 = arith.constant 0 : index
    %43 = vector.load %arg8[%c0_21, %c0_22] : memref<128x32xf32, #tpu.memory_space<vmem>>, vector<128x32xf32>
    tpu.vector_store %arg8[%c0_21, %c0_22], %42 {strides = array<i32>} : memref<128x32xf32, #tpu.memory_space<vmem>>, vector<128x32xf32>,
    return
  }
  func.func @transform_0(%arg0: i32) -> (i32, i32) {
    %c0_i32 = arith.constant 0 : i32
    %c0_i32_0 = arith.constant 0 : i32
    return %arg0, %c0_i32 : i32, i32
  }
  func.func @transform_1(%arg0: i32) -> (i32, i32) {
    %c0_i32 = arith.constant 0 : i32
    %c0_i32_0 = arith.constant 0 : i32
    %c0_i32_1 = arith.constant 0 : i32
    return %c0_i32, %c0_i32_0 : i32, i32
  }
  func.func @transform_2(%arg0: i32) -> (i32, i32) {
    %c0_i32 = arith.constant 0 : i32
    %c0_i32_0 = arith.constant 0 : i32
    %c0_i32_1 = arith.constant 0 : i32
    return %c0_i32, %c0_i32_0 : i32, i32
  }
  func.func @transform_3(%arg0: i32) -> (i32, i32) {
    %c0_i32 = arith.constant 0 : i32
    %c0_i32_0 = arith.constant 0 : i32
    %c0_i32_1 = arith.constant 0 : i32
    return %c0_i32, %c0_i32_0 : i32, i32
  }
  func.func @transform_4(%arg0: i32) -> (i32, i32) {
    %c0_i32 = arith.constant 0 : i32
    %c0_i32_0 = arith.constant 0 : i32
    %c0_i32_1 = arith.constant 0 : i32
    return %c0_i32, %c0_i32_0 : i32, i32
  }
  func.func @transform_5(%arg0: i32) -> (i32, i32) {
    %c0_i32 = arith.constant 0 : i32
    %c0_i32_0 = arith.constant 0 : i32
    %c0_i32_1 = arith.constant 0 : i32
    return %c0_i32, %c0_i32_0 : i32, i32
  }
  func.func @transform_6(%arg0: i32) -> (i32, i32) {
    %c0_i32 = arith.constant 0 : i32
    %c0_i32_0 = arith.constant 0 : i32
    %c0_i32_1 = arith.constant 0 : i32
    return %c0_i32, %c0_i32_0 : i32, i32
  }
  func.func @transform_7(%arg0: i32) -> (i32, i32) {
    %c0_i32 = arith.constant 0 : i32
    %c0_i32_0 = arith.constant 0 : i32
    return %arg0, %c0_i32 : i32, i32
  }
}

module attributes {stable_mosaic.version = 11 : i64} {
  func.func @kernel(%arg0: i32, %arg1: memref<128x128xbf16, #tpu.memory_space<vmem>>, %arg2: memref<128x128xbf16, #tpu.memory_space<vmem>>, %arg3: memref<1x128xf32, #tpu.memory_space<vmem>>, %arg4: memref<128x128xbf16, #tpu.memory_space<vmem>>, %arg5: memref<1x128xf32, #tpu.memory_space<vmem>>, %arg6: memref<1x128xf32, #tpu.memory_space<vmem>>, %arg7: memref<1x128xf32, #tpu.memory_space<vmem>>, %arg8: memref<128x32xf32, #tpu.memory_space<vmem>>) attributes {dimension_semantics = [#tpu.dimension_semantics<parallel>], iteration_bounds = array<i64: 1>, scalar_prefetch = 0 : i64, scratch_operands = 0 : i64, tpu.core_type = #tpu.core_type<tc>, window_params = [{transform_indices = @transform_0, window_bounds = array<i64: 128, 128>}, {pipeline_mode = #tpu.pipeline_mode<synchronous>, transform_indices = @transform_1, window_bounds = array<i64: 128, 128>}, {pipeline_mode = #tpu.pipeline_mode<synchronous>, transform_indices = @transform_2, window_bounds = array<i64: 1, 128>}, {pipeline_mode = #tpu.pipeline_mode<synchronous>, transform_indices = @transform_3, window_bounds = array<i64: 128, 128>}, {pipeline_mode = #tpu.pipeline_mode<synchronous>, transform_indices = @transform_4, window_bounds = array<i64: 1, 128>}, {pipeline_mode = #tpu.pipeline_mode<synchronous>, transform_indices = @transform_5, window_bounds = array<i64: 1, 128>}, {pipeline_mode = #tpu.pipeline_mode<synchronous>, transform_indices = @transform_6, window_bounds = array<i64: 1, 128>}, {transform_indices = @transform_7, window_bounds = array<i64: 128, 32>}]} {
    %c0 = arith.constant 0 : index
    %c0_0 = arith.constant 0 : index
    %0 = vector.load %arg1[%c0, %c0_0] : memref<128x128xbf16, #tpu.memory_space<vmem>>, vector<128x128xbf16>
    %c0_1 = arith.constant 0 : index
    %c0_2 = arith.constant 0 : index
    %1 = vector.load %arg2[%c0_1, %c0_2] : memref<128x128xbf16, #tpu.memory_space<vmem>>, vector<128x128xbf16>
    %cst = arith.constant dense<0.000000e+00> : vector<128x128xf32>
    %2 = tpu.matmul %0, %1, %cst {dimension_numbers = #tpu.dot_dimension_numbers<[1], [0], [0], [1], [0, 0, 1, 1], [], []>} : vector<128x128xbf16>, vector<128x128xbf16>, vector<128x128xf32> -> vector<128x128xf32>
    %c0_3 = arith.constant 0 : index
    %c0_4 = arith.constant 0 : index
    %3 = vector.load %arg3[%c0_3, %c0_4] : memref<1x128xf32, #tpu.memory_space<vmem>>, vector<1x128xf32>
    %4 = vector.broadcast %3 : vector<1x128xf32> to vector<128x128xf32>
    %5 = arith.addf %2, %4 : vector<128x128xf32>
    %cst_5 = arith.constant 0.000000e+00 : f32
    %6 = vector.broadcast %cst_5 : f32 to vector<128x128xf32>
    %7 = arith.maximumf %5, %6 : vector<128x128xf32>
    %8 = arith.truncf %7 : vector<128x128xf32> to vector<128x128xbf16>
    %c0_6 = arith.constant 0 : index
    %c0_7 = arith.constant 0 : index
    %9 = vector.load %arg4[%c0_6, %c0_7] : memref<128x128xbf16, #tpu.memory_space<vmem>>, vector<128x128xbf16>
    %cst_8 = arith.constant dense<0.000000e+00> : vector<128x128xf32>
    %10 = tpu.matmul %8, %9, %cst_8 {dimension_numbers = #tpu.dot_dimension_numbers<[1], [0], [0], [1], [0, 0, 1, 1], [], []>} : vector<128x128xbf16>, vector<128x128xbf16>, vector<128x128xf32> -> vector<128x128xf32>
    %c0_9 = arith.constant 0 : index
    %c0_10 = arith.constant 0 : index
    %11 = vector.load %arg5[%c0_9, %c0_10] : memref<1x128xf32, #tpu.memory_space<vmem>>, vector<1x128xf32>
    %12 = vector.broadcast %11 : vector<1x128xf32> to vector<128x128xf32>
    %13 = arith.addf %10, %12 : vector<128x128xf32>
    %14 = arith.addf %5, %13 : vector<128x128xf32>
    %cst_11 = arith.constant dense<0.000000e+00> : vector<128xf32>
    %15 = vector.multi_reduction <add>, %14, %cst_11 [1] : vector<128x128xf32> to vector<128xf32>
    %16 = vector.shape_cast %15 : vector<128xf32> to vector<128x1xf32>
    %cst_12 = arith.constant 3.125000e-02 : f32
    %17 = vector.broadcast %cst_12 : f32 to vector<128x1xf32>
    %18 = arith.mulf %16, %17 : vector<128x1xf32>
    %19 = vector.broadcast %18 : vector<128x1xf32> to vector<128x128xf32>
    %20 = arith.subf %14, %19 : vector<128x128xf32>
    %21 = tpu.iota {dimensions = array<i32: 1>} : vector<128x128xi32>
    %c32_i32 = arith.constant 32 : i32
    %22 = vector.broadcast %c32_i32 : i32 to vector<128x128xi32>
    %23 = arith.cmpi slt, %21, %22 : vector<128x128xi32>
    %cst_13 = arith.constant 0.000000e+00 : f32
    %24 = vector.broadcast %cst_13 : f32 to vector<128x128xf32>
    %25 = arith.select %23, %20, %24 : vector<128x128xi1>, vector<128x128xf32>
    %26 = arith.mulf %25, %25 : vector<128x128xf32>
    %cst_14 = arith.constant dense<0.000000e+00> : vector<128xf32>
    %27 = vector.multi_reduction <add>, %26, %cst_14 [1] : vector<128x128xf32> to vector<128xf32>
    %28 = vector.shape_cast %27 : vector<128xf32> to vector<128x1xf32>
    %cst_15 = arith.constant 3.125000e-02 : f32
    %29 = vector.broadcast %cst_15 : f32 to vector<128x1xf32>
    %30 = arith.mulf %28, %29 : vector<128x1xf32>
    %cst_16 = arith.constant 9.99999974E-6 : f32
    %31 = vector.broadcast %cst_16 : f32 to vector<128x1xf32>
    %32 = arith.addf %30, %31 : vector<128x1xf32>
    %33 = math.rsqrt %32 : vector<128x1xf32>
    %34 = vector.broadcast %33 : vector<128x1xf32> to vector<128x128xf32>
    %35 = arith.mulf %25, %34 : vector<128x128xf32>
    %c0_17 = arith.constant 0 : index
    %c0_18 = arith.constant 0 : index
    %36 = vector.load %arg6[%c0_17, %c0_18] : memref<1x128xf32, #tpu.memory_space<vmem>>, vector<1x128xf32>
    %37 = vector.broadcast %36 : vector<1x128xf32> to vector<128x128xf32>
    %38 = arith.mulf %35, %37 : vector<128x128xf32>
    %c0_19 = arith.constant 0 : index
    %c0_20 = arith.constant 0 : index
    %39 = vector.load %arg7[%c0_19, %c0_20] : memref<1x128xf32, #tpu.memory_space<vmem>>, vector<1x128xf32>
    %40 = vector.broadcast %39 : vector<1x128xf32> to vector<128x128xf32>
    %41 = arith.addf %38, %40 : vector<128x128xf32>
    %42 = vector.extract_strided_slice %41 {offsets = [0, 0], sizes = [128, 32], strides = [1, 1]} : vector<128x128xf32> to vector<128x32xf32>
    %c0_21 = arith.constant 0 : index
    %c0_22 = arith.constant 0 : index
    %43 = vector.load %arg8[%c0_21, %c0_22] : memref<128x32xf32, #tpu.memory_space<vmem>>, vector<128x32xf32>
    tpu.vector_store %arg8[%c0_21, %c0_22], %42 {strides = array<i32>} : memref<128x32xf32, #tpu.memory_space<vmem>>, vector<128x32xf32>,
    return
  }
  func.func @transform_0(%arg0: i32) -> (i32, i32) {
    %c0_i32 = arith.constant 0 : i32
    %c0_i32_0 = arith.constant 0 : i32
    return %arg0, %c0_i32 : i32, i32
  }
  func.func @transform_1(%arg0: i32) -> (i32, i32) {
    %c0_i32 = arith.constant 0 : i32
    %c0_i32_0 = arith.constant 0 : i32
    %c0_i32_1 = arith.constant 0 : i32
    return %c0_i32, %c0_i32_0 : i32, i32
  }
  func.func @transform_2(%arg0: i32) -> (i32, i32) {
    %c0_i32 = arith.constant 0 : i32
    %c0_i32_0 = arith.constant 0 : i32
    %c0_i32_1 = arith.constant 0 : i32
    return %c0_i32, %c0_i32_0 : i32, i32
  }
  func.func @transform_3(%arg0: i32) -> (i32, i32) {
    %c0_i32 = arith.constant 0 : i32
    %c0_i32_0 = arith.constant 0 : i32
    %c0_i32_1 = arith.constant 0 : i32
    return %c0_i32, %c0_i32_0 : i32, i32
  }
  func.func @transform_4(%arg0: i32) -> (i32, i32) {
    %c0_i32 = arith.constant 0 : i32
    %c0_i32_0 = arith.constant 0 : i32
    %c0_i32_1 = arith.constant 0 : i32
    return %c0_i32, %c0_i32_0 : i32, i32
  }
  func.func @transform_5(%arg0: i32) -> (i32, i32) {
    %c0_i32 = arith.constant 0 : i32
    %c0_i32_0 = arith.constant 0 : i32
    %c0_i32_1 = arith.constant 0 : i32
    return %c0_i32, %c0_i32_0 : i32, i32
  }
  func.func @transform_6(%arg0: i32) -> (i32, i32) {
    %c0_i32 = arith.constant 0 : i32
    %c0_i32_0 = arith.constant 0 : i32
    %c0_i32_1 = arith.constant 0 : i32
    return %c0_i32, %c0_i32_0 : i32, i32
  }
  func.func @transform_7(%arg0: i32) -> (i32, i32) {
    %c0_i32 = arith.constant 0 : i32
    %c0_i32_0 = arith.constant 0 : i32
    return %arg0, %c0_i32 : i32, i32
  }
}

</mosaic_0001>

<llo_original>
// kernel: _feed_forward_impl.1
$region0: #{_feed_forward_impl.1}
  #allocation0 [shape = 'u32[]', space=smem, size = 0x4, offset = 0x4, fixed_abs, tag = 'smem constant byte address 0x4 - core index']
  #allocation1 [shape = 'u32[144,128]{1,0:T(1,128)}', space=vmem, size = 0x12000, scoped, tag = 'internal scratch']
  %s0 = inlined_call_operand.vmem [shape: bf16[16,128], index: 0, kind: input, shape index: {}]
  %s1 = inlined_call_operand.vmem [shape: bf16[128,128], index: 1, kind: input, shape index: {}]
  %s2 = inlined_call_operand.vmem [shape: f32[1,128], index: 2, kind: input, shape index: {}]
  %s3 = inlined_call_operand.vmem [shape: bf16[128,128], index: 3, kind: input, shape index: {}]
  %s4 = inlined_call_operand.vmem [shape: f32[1,128], index: 4, kind: input, shape index: {}]
  %s5 = inlined_call_operand.vmem [shape: f32[1,128], index: 5, kind: input, shape index: {}]
  %s6 = inlined_call_operand.vmem [shape: f32[1,128], index: 6, kind: input, shape index: {}]
  %s7 = inlined_call_operand.hbm [shape: f32[16,32], index: 7, kind: output, shape index: {}]
  %s8 = sld [smem:[#allocation0]]
  $region38: #{_feed_forward_impl.1} parent=0
    _
  %s10 = ssub.s32 1, %s8
  %s11 = scalar_select 0, %s10, %s8
  $region1: #{_feed_forward_impl.1} parent=0
    #allocation2 [shape = 'u8[65536]{0}', space=vmem, size = 0x10000, scoped, tag = 'output window, operand 0, single buffered']
    #allocation3 [shape = 's32[1]{0}', space=sflag, size = 0x4, scoped, tag = 'scoped memory for _feed_forward_impl.1']
    %12 = vsyncpa [#allocation3], 0
    // Predicated region
    $region2: #{_feed_forward_impl.1} parent=1 // pred_check
      _
    $region3: #{_feed_forward_impl.1} parent=1 // pred_check_branch
      %14 = sbr.rel (0) target = $region5
    $region4: #{_feed_forward_impl.1} parent=1 // pred_region
      _
    $region5: #{_feed_forward_impl.1} parent=1 // pred_fallthru
      _
    // Predicated region
    $region6: #{_feed_forward_impl.1} parent=1 // pred_check
      _
    $region7: #{_feed_forward_impl.1} parent=1 // pred_check_branch
      %16 = sbr.rel (0) target = $region9
    $region8: #{_feed_forward_impl.1} parent=1 // pred_region
      _
    $region9: #{_feed_forward_impl.1} parent=1 // pred_fallthru
      _
    // Predicated region
    $region10: #{_feed_forward_impl.1} parent=1 // pred_check
      _
    $region11: #{_feed_forward_impl.1} parent=1 // pred_check_branch
      %18 = sbr.rel (0) target = $region13
    $region12: #{_feed_forward_impl.1} parent=1 // pred_region
      _
    $region13: #{_feed_forward_impl.1} parent=1 // pred_fallthru
      _
    // Predicated region
    $region14: #{_feed_forward_impl.1} parent=1 // pred_check
      _
    $region15: #{_feed_forward_impl.1} parent=1 // pred_check_branch
      %20 = sbr.rel (0) target = $region17
    $region16: #{_feed_forward_impl.1} parent=1 // pred_region
      _
    $region17: #{_feed_forward_impl.1} parent=1 // pred_fallthru
      _
    // Predicated region
    $region18: #{_feed_forward_impl.1} parent=1 // pred_check
      _
    $region19: #{_feed_forward_impl.1} parent=1 // pred_check_branch
      %22 = sbr.rel (0) target = $region21
    $region20: #{_feed_forward_impl.1} parent=1 // pred_region
      _
    $region21: #{_feed_forward_impl.1} parent=1 // pred_fallthru
      _
    // Predicated region
    $region22: #{_feed_forward_impl.1} parent=1 // pred_check
      _
    $region23: #{_feed_forward_impl.1} parent=1 // pred_check_branch
      %24 = sbr.rel (0) target = $region25
    $region24: #{_feed_forward_impl.1} parent=1 // pred_region
      _
    $region25: #{_feed_forward_impl.1} parent=1 // pred_fallthru
      _
    // Predicated region
    $region26: #{_feed_forward_impl.1} parent=1 // pred_check
      _
    $region27: #{_feed_forward_impl.1} parent=1 // pred_check_branch
      %26 = sbr.rel (0) target = $region29
    $region28: #{_feed_forward_impl.1} parent=1 // pred_region
      _
    $region29: #{_feed_forward_impl.1} parent=1 // pred_fallthru
      _
    %v28 = vld [vmem:[%s0] sm:$0xf]
    %v29 = vld [vmem:[%s0 + $0x4] sm:$0xf]
    %v30 = vld [vmem:[%s0 + $0x8] sm:$0xf]
    %v31 = vld [vmem:[%s0 + $0xc] sm:$0xf]
    %v32 = vld [vmem:[%s0 + $0x10] sm:$0xf]
    %v33 = vld [vmem:[%s0 + $0x14] sm:$0xf]
    %v34 = vld [vmem:[%s0 + $0x18] sm:$0xf]
    %v35 = vld [vmem:[%s0 + $0x1c] sm:$0xf]
    %v36 = vld [vmem:[%s0 + $0x20] sm:$0xf]
    %v37 = vld [vmem:[%s0 + $0x24] sm:$0xf]
    %v38 = vld [vmem:[%s0 + $0x28] sm:$0xf]
    %v39 = vld [vmem:[%s0 + $0x2c] sm:$0xf]
    %v40 = vld [vmem:[%s0 + $0x30] sm:$0xf]
    %v41 = vld [vmem:[%s0 + $0x34] sm:$0xf]
    %v42 = vld [vmem:[%s0 + $0x38] sm:$0xf]
    %v43 = vld [vmem:[%s0 + $0x3c] sm:$0xf]
    %v44 = vld [vmem:[%s1] sm:$0xf]
    %v45 = vld [vmem:[%s1 + $0x4] sm:$0xf]
    %v46 = vld [vmem:[%s1 + $0x8] sm:$0xf]
    %v47 = vld [vmem:[%s1 + $0xc] sm:$0xf]
    %v48 = vld [vmem:[%s1 + $0x10] sm:$0xf]
    %v49 = vld [vmem:[%s1 + $0x14] sm:$0xf]
    %v50 = vld [vmem:[%s1 + $0x18] sm:$0xf]
    %v51 = vld [vmem:[%s1 + $0x1c] sm:$0xf]
    %v52 = vld [vmem:[%s1 + $0x20] sm:$0xf]
    %v53 = vld [vmem:[%s1 + $0x24] sm:$0xf]
    %v54 = vld [vmem:[%s1 + $0x28] sm:$0xf]
    %v55 = vld [vmem:[%s1 + $0x2c] sm:$0xf]
    %v56 = vld [vmem:[%s1 + $0x30] sm:$0xf]
    %v57 = vld [vmem:[%s1 + $0x34] sm:$0xf]
    %v58 = vld [vmem:[%s1 + $0x38] sm:$0xf]
    %v59 = vld [vmem:[%s1 + $0x3c] sm:$0xf]
    %v60 = vld [vmem:[%s2] sm:$0x1]
    %v62 = vlaneseq
    %v63 = vshrl.u32 %v62, 7
    %v64 = vsub.s32 0, %v63
    %v65 = vrot.slane %v60, %v64
    %v83 = vunpack.c.l.b16 %v28
    %v84 = vunpack.c.l.b16 %v29
    %v85 = vunpack.c.l.b16 %v30
    %v86 = vunpack.c.l.b16 %v31
    %v87 = vunpack.c.l.b16 %v32
    %v88 = vunpack.c.l.b16 %v33
    %v89 = vunpack.c.l.b16 %v34
    %v90 = vunpack.c.l.b16 %v35
    %v91 = vunpack.c.l.b16 %v36
    %v92 = vunpack.c.l.b16 %v37
    %v93 = vunpack.c.l.b16 %v38
    %v94 = vunpack.c.l.b16 %v39
    %v95 = vunpack.c.l.b16 %v40
    %v96 = vunpack.c.l.b16 %v41
    %v97 = vunpack.c.l.b16 %v42
    %v98 = vunpack.c.l.b16 %v43
    %v99 = vpack.c.b16 %v84, %v83
    %v100 = vpack.c.b16 %v86, %v85
    %v101 = vpack.c.b16 %v88, %v87
    %v102 = vpack.c.b16 %v90, %v89
    %v103 = vpack.c.b16 %v92, %v91
    %v104 = vpack.c.b16 %v94, %v93
    %v105 = vpack.c.b16 %v96, %v95
    %v106 = vpack.c.b16 %v98, %v97
    %v131 = vunpack.c.l.b16 %v44
    %v132 = vunpack.c.l.b16 %v45
    %v133 = vunpack.c.l.b16 %v46
    %v134 = vunpack.c.l.b16 %v47
    %v135 = vunpack.c.l.b16 %v48
    %v136 = vunpack.c.l.b16 %v49
    %v137 = vunpack.c.l.b16 %v50
    %v138 = vunpack.c.l.b16 %v51
    %v139 = vunpack.c.l.b16 %v52
    %v140 = vunpack.c.l.b16 %v53
    %v141 = vunpack.c.l.b16 %v54
    %v142 = vunpack.c.l.b16 %v55
    %v143 = vunpack.c.l.b16 %v56
    %v144 = vunpack.c.l.b16 %v57
    %v145 = vunpack.c.l.b16 %v58
    %v146 = vunpack.c.l.b16 %v59
    %v147 = vpack.c.b16 %v132, %v131
    %v148 = vpack.c.b16 %v134, %v133
    %v149 = vpack.c.b16 %v136, %v135
    %v150 = vpack.c.b16 %v138, %v137
    %v151 = vpack.c.b16 %v140, %v139
    %v152 = vpack.c.b16 %v142, %v141
    %v153 = vpack.c.b16 %v144, %v143
    %v154 = vpack.c.b16 %v146, %v145
    %163 = vmatprep.subr.bf16.mxu0 0
    %164 = vmatpush1.bf16.msra.mxu0 %v147
    %165 = vmatprep.subr.bf16.mxu0 0
    %166 = vmatpush1.bf16.msra.mxu0 %v148
    %167 = vmatprep.subr.bf16.mxu0 0
    %168 = vmatpush1.bf16.msra.mxu0 %v149
    %169 = vmatprep.subr.bf16.mxu0 0
    %170 = vmatpush1.bf16.msra.mxu0 %v150
    %171 = vmatprep.subr.bf16.mxu0 0
    %172 = vmatpush1.bf16.msra.mxu0 %v151
    %173 = vmatprep.subr.bf16.mxu0 0
    %174 = vmatpush1.bf16.msra.mxu0 %v152
    %175 = vmatprep.subr.bf16.mxu0 0
    %176 = vmatpush1.bf16.msra.mxu0 %v153
    %177 = vmatprep.subr.bf16.mxu0 0
    %178 = vmatpush1.bf16.msra.mxu0 %v154
    %179 = vmatprep.subr.bf16.mxu0 0
    %180 = vmatpush1.bf16.msra.mxu0 0
    %181 = vmatprep.subr.bf16.mxu0 0
    %182 = vmatpush1.bf16.msra.mxu0 0
    %183 = vmatprep.subr.bf16.mxu0 0
    %184 = vmatpush1.bf16.msra.mxu0 0
    %185 = vmatprep.subr.bf16.mxu0 0
    %186 = vmatpush1.bf16.msra.mxu0 0
    %187 = vmatprep.subr.bf16.mxu0 0
    %188 = vmatpush1.bf16.msra.mxu0 0
    %189 = vmatprep.subr.bf16.mxu0 0
    %190 = vmatpush1.bf16.msra.mxu0 0
    %191 = vmatprep.subr.bf16.mxu0 0
    %192 = vmatpush1.bf16.msra.mxu0 0
    %193 = vmatprep.subr.bf16.mxu0 0
    %194 = vmatpush1.bf16.msra.mxu0 0
    %195 = vmatprep.mubr.bf16.mxu0 0
    %196 = vmatmul.mubr.bf16.gmra.mrb[0].mxu0 %v99
    %v197 = vpop.f32.mrb[0].mxu0
    %v198 = vadd.f32 %v65, %v197
    %v199 = vpop.f32.mrb[0].mxu0
    %v200 = vpop.f32.mrb[0].mxu0
    %v201 = vadd.f32 %v65, %v200
    %v202 = vpop.f32.mrb[0].mxu0
    %203 = vmatprep.mubr.bf16.mxu0 0
    %204 = vmatmul.mubr.bf16.gmra.mrb[0].mxu0 %v100
    %v205 = vpop.f32.mrb[0].mxu0
    %v206 = vadd.f32 %v65, %v205
    %v207 = vpop.f32.mrb[0].mxu0
    %v208 = vpop.f32.mrb[0].mxu0
    %v209 = vadd.f32 %v65, %v208
    %v210 = vpop.f32.mrb[0].mxu0
    %211 = vmatprep.mubr.bf16.mxu0 0
    %212 = vmatmul.mubr.bf16.gmra.mrb[0].mxu0 %v101
    %v213 = vpop.f32.mrb[0].mxu0
    %v214 = vadd.f32 %v65, %v213
    %v215 = vpop.f32.mrb[0].mxu0
    %v216 = vpop.f32.mrb[0].mxu0
    %v217 = vadd.f32 %v65, %v216
    %v218 = vpop.f32.mrb[0].mxu0
    %219 = vmatprep.mubr.bf16.mxu0 0
    %220 = vmatmul.mubr.bf16.gmra.mrb[0].mxu0 %v102
    %v221 = vpop.f32.mrb[0].mxu0
    %v222 = vadd.f32 %v65, %v221
    %v223 = vpop.f32.mrb[0].mxu0
    %v224 = vpop.f32.mrb[0].mxu0
    %v225 = vadd.f32 %v65, %v224
    %v226 = vpop.f32.mrb[0].mxu0
    %227 = vmatprep.mubr.bf16.mxu0 0
    %228 = vmatmul.mubr.bf16.gmra.mrb[0].mxu0 %v103
    %v229 = vpop.f32.mrb[0].mxu0
    %v230 = vadd.f32 %v65, %v229
    %v231 = vpop.f32.mrb[0].mxu0
    %v232 = vpop.f32.mrb[0].mxu0
    %v233 = vadd.f32 %v65, %v232
    %v234 = vpop.f32.mrb[0].mxu0
    %235 = vmatprep.mubr.bf16.mxu0 0
    %236 = vmatmul.mubr.bf16.gmra.mrb[0].mxu0 %v104
    %v237 = vpop.f32.mrb[0].mxu0
    %v238 = vadd.f32 %v65, %v237
    %v239 = vpop.f32.mrb[0].mxu0
    %v240 = vpop.f32.mrb[0].mxu0
    %v241 = vadd.f32 %v65, %v240
    %v242 = vpop.f32.mrb[0].mxu0
    %243 = vmatprep.mubr.bf16.mxu0 0
    %244 = vmatmul.mubr.bf16.gmra.mrb[0].mxu0 %v105
    %v245 = vpop.f32.mrb[0].mxu0
    %v246 = vadd.f32 %v65, %v245
    %v247 = vpop.f32.mrb[0].mxu0
    %v248 = vpop.f32.mrb[0].mxu0
    %v249 = vadd.f32 %v65, %v248
    %v250 = vpop.f32.mrb[0].mxu0
    %251 = vmatprep.mubr.bf16.mxu0 0
    %252 = vmatmul.mubr.bf16.gmra.mrb[0].mxu0 %v106
    %v253 = vpop.f32.mrb[0].mxu0
    %v254 = vadd.f32 %v65, %v253
    %v255 = vpop.f32.mrb[0].mxu0
    %v256 = vpop.f32.mrb[0].mxu0
    %v257 = vadd.f32 %v65, %v256
    %v258 = vpop.f32.mrb[0].mxu0
    %259 = vdwg.mxu0
    %v260 = vmax.f32 %v198, 0.0
    %v261 = vmax.f32 %v201, 0.0
    %v262 = vmax.f32 %v206, 0.0
    %v263 = vmax.f32 %v209, 0.0
    %v264 = vmax.f32 %v214, 0.0
    %v265 = vmax.f32 %v217, 0.0
    %v266 = vmax.f32 %v222, 0.0
    %v267 = vmax.f32 %v225, 0.0
    %v268 = vmax.f32 %v230, 0.0
    %v269 = vmax.f32 %v233, 0.0
    %v270 = vmax.f32 %v238, 0.0
    %v271 = vmax.f32 %v241, 0.0
    %v272 = vmax.f32 %v246, 0.0
    %v273 = vmax.f32 %v249, 0.0
    %v274 = vmax.f32 %v254, 0.0
    %v275 = vmax.f32 %v257, 0.0
    %v276 = vpack.c.bf16 %v261, %v260
    %v277 = vpack.c.bf16 %v263, %v262
    %v278 = vpack.c.bf16 %v265, %v264
    %v279 = vpack.c.bf16 %v267, %v266
    %v280 = vpack.c.bf16 %v269, %v268
    %v281 = vpack.c.bf16 %v271, %v270
    %v282 = vpack.c.bf16 %v273, %v272
    %v283 = vpack.c.bf16 %v275, %v274
    %v284 = vld [vmem:[%s3] sm:$0xf]
    %v285 = vld [vmem:[%s3 + $0x4] sm:$0xf]
    %v286 = vld [vmem:[%s3 + $0x8] sm:$0xf]
    %v287 = vld [vmem:[%s3 + $0xc] sm:$0xf]
    %v288 = vld [vmem:[%s3 + $0x10] sm:$0xf]
    %v289 = vld [vmem:[%s3 + $0x14] sm:$0xf]
    %v290 = vld [vmem:[%s3 + $0x18] sm:$0xf]
    %v291 = vld [vmem:[%s3 + $0x1c] sm:$0xf]
    %v292 = vld [vmem:[%s3 + $0x20] sm:$0xf]
    %v293 = vld [vmem:[%s3 + $0x24] sm:$0xf]
    %v294 = vld [vmem:[%s3 + $0x28] sm:$0xf]
    %v295 = vld [vmem:[%s3 + $0x2c] sm:$0xf]
    %v296 = vld [vmem:[%s3 + $0x30] sm:$0xf]
    %v297 = vld [vmem:[%s3 + $0x34] sm:$0xf]
    %v298 = vld [vmem:[%s3 + $0x38] sm:$0xf]
    %v299 = vld [vmem:[%s3 + $0x3c] sm:$0xf]
    %v300 = vld [vmem:[%s4] sm:$0x1]
    %v302 = vlaneseq
    %v303 = vshrl.u32 %v302, 7
    %v304 = vsub.s32 0, %v303
    %v305 = vrot.slane %v300, %v304
    %v323 = vunpack.c.l.b16 %v284
    %v324 = vunpack.c.l.b16 %v285
    %v325 = vunpack.c.l.b16 %v286
    %v326 = vunpack.c.l.b16 %v287
    %v327 = vunpack.c.l.b16 %v288
    %v328 = vunpack.c.l.b16 %v289
    %v329 = vunpack.c.l.b16 %v290
    %v330 = vunpack.c.l.b16 %v291
    %v331 = vunpack.c.l.b16 %v292
    %v332 = vunpack.c.l.b16 %v293
    %v333 = vunpack.c.l.b16 %v294
    %v334 = vunpack.c.l.b16 %v295
    %v335 = vunpack.c.l.b16 %v296
    %v336 = vunpack.c.l.b16 %v297
    %v337 = vunpack.c.l.b16 %v298
    %v338 = vunpack.c.l.b16 %v299
    %v339 = vpack.c.b16 %v324, %v323
    %v340 = vpack.c.b16 %v326, %v325
    %v341 = vpack.c.b16 %v328, %v327
    %v342 = vpack.c.b16 %v330, %v329
    %v343 = vpack.c.b16 %v332, %v331
    %v344 = vpack.c.b16 %v334, %v333
    %v345 = vpack.c.b16 %v336, %v335
    %v346 = vpack.c.b16 %v338, %v337
    %355 = vmatprep.subr.bf16.mxu0 0
    %356 = vmatpush1.bf16.msra.mxu0 %v339
    %357 = vmatprep.subr.bf16.mxu0 0
    %358 = vmatpush1.bf16.msra.mxu0 %v340
    %359 = vmatprep.subr.bf16.mxu0 0
    %360 = vmatpush1.bf16.msra.mxu0 %v341
    %361 = vmatprep.subr.bf16.mxu0 0
    %362 = vmatpush1.bf16.msra.mxu0 %v342
    %363 = vmatprep.subr.bf16.mxu0 0
    %364 = vmatpush1.bf16.msra.mxu0 %v343
    %365 = vmatprep.subr.bf16.mxu0 0
    %366 = vmatpush1.bf16.msra.mxu0 %v344
    %367 = vmatprep.subr.bf16.mxu0 0
    %368 = vmatpush1.bf16.msra.mxu0 %v345
    %369 = vmatprep.subr.bf16.mxu0 0
    %370 = vmatpush1.bf16.msra.mxu0 %v346
    %371 = vmatprep.subr.bf16.mxu0 0
    %372 = vmatpush1.bf16.msra.mxu0 0
    %373 = vmatprep.subr.bf16.mxu0 0
    %374 = vmatpush1.bf16.msra.mxu0 0
    %375 = vmatprep.subr.bf16.mxu0 0
    %376 = vmatpush1.bf16.msra.mxu0 0
    %377 = vmatprep.subr.bf16.mxu0 0
    %378 = vmatpush1.bf16.msra.mxu0 0
    %379 = vmatprep.subr.bf16.mxu0 0
    %380 = vmatpush1.bf16.msra.mxu0 0
    %381 = vmatprep.subr.bf16.mxu0 0
    %382 = vmatpush1.bf16.msra.mxu0 0
    %383 = vmatprep.subr.bf16.mxu0 0
    %384 = vmatpush1.bf16.msra.mxu0 0
    %385 = vmatprep.subr.bf16.mxu0 0
    %386 = vmatpush1.bf16.msra.mxu0 0
    %387 = vmatprep.mubr.bf16.mxu0 0
    %388 = vmatmul.mubr.bf16.gmra.mrb[0].mxu0 %v276
    %v389 = vpop.f32.mrb[0].mxu0
    %v390 = vadd.f32 %v305, %v389
    %v391 = vpop.f32.mrb[0].mxu0
    %v392 = vpop.f32.mrb[0].mxu0
    %v393 = vadd.f32 %v305, %v392
    %v394 = vpop.f32.mrb[0].mxu0
    %395 = vmatprep.mubr.bf16.mxu0 0
    %396 = vmatmul.mubr.bf16.gmra.mrb[0].mxu0 %v277
    %v397 = vpop.f32.mrb[0].mxu0
    %v398 = vadd.f32 %v305, %v397
    %v399 = vpop.f32.mrb[0].mxu0
    %v400 = vpop.f32.mrb[0].mxu0
    %v401 = vadd.f32 %v305, %v400
    %v402 = vpop.f32.mrb[0].mxu0
    %403 = vmatprep.mubr.bf16.mxu0 0
    %404 = vmatmul.mubr.bf16.gmra.mrb[0].mxu0 %v278
    %v405 = vpop.f32.mrb[0].mxu0
    %v406 = vadd.f32 %v305, %v405
    %v407 = vpop.f32.mrb[0].mxu0
    %v408 = vpop.f32.mrb[0].mxu0
    %v409 = vadd.f32 %v305, %v408
    %v410 = vpop.f32.mrb[0].mxu0
    %411 = vmatprep.mubr.bf16.mxu0 0
    %412 = vmatmul.mubr.bf16.gmra.mrb[0].mxu0 %v279
    %v413 = vpop.f32.mrb[0].mxu0
    %v414 = vadd.f32 %v305, %v413
    %v415 = vpop.f32.mrb[0].mxu0
    %v416 = vpop.f32.mrb[0].mxu0
    %v417 = vadd.f32 %v305, %v416
    %v418 = vpop.f32.mrb[0].mxu0
    %419 = vmatprep.mubr.bf16.mxu0 0
    %420 = vmatmul.mubr.bf16.gmra.mrb[0].mxu0 %v280
    %v421 = vpop.f32.mrb[0].mxu0
    %v422 = vadd.f32 %v305, %v421
    %v423 = vpop.f32.mrb[0].mxu0
    %v424 = vpop.f32.mrb[0].mxu0
    %v425 = vadd.f32 %v305, %v424
    %v426 = vpop.f32.mrb[0].mxu0
    %427 = vmatprep.mubr.bf16.mxu0 0
    %428 = vmatmul.mubr.bf16.gmra.mrb[0].mxu0 %v281
    %v429 = vpop.f32.mrb[0].mxu0
    %v430 = vadd.f32 %v305, %v429
    %v431 = vpop.f32.mrb[0].mxu0
    %v432 = vpop.f32.mrb[0].mxu0
    %v433 = vadd.f32 %v305, %v432
    %v434 = vpop.f32.mrb[0].mxu0
    %435 = vmatprep.mubr.bf16.mxu0 0
    %436 = vmatmul.mubr.bf16.gmra.mrb[0].mxu0 %v282
    %v437 = vpop.f32.mrb[0].mxu0
    %v438 = vadd.f32 %v305, %v437
    %v439 = vpop.f32.mrb[0].mxu0
    %v440 = vpop.f32.mrb[0].mxu0
    %v441 = vadd.f32 %v305, %v440
    %v442 = vpop.f32.mrb[0].mxu0
    %443 = vmatprep.mubr.bf16.mxu0 0
    %444 = vmatmul.mubr.bf16.gmra.mrb[0].mxu0 %v283
    %v445 = vpop.f32.mrb[0].mxu0
    %v446 = vadd.f32 %v305, %v445
    %v447 = vpop.f32.mrb[0].mxu0
    %v448 = vpop.f32.mrb[0].mxu0
    %v449 = vadd.f32 %v305, %v448
    %v450 = vpop.f32.mrb[0].mxu0
    %451 = vdwg.mxu0
    %v452 = vadd.f32 %v198, %v390
    %v453 = vadd.f32 %v201, %v393
    %v454 = vadd.f32 %v206, %v398
    %v455 = vadd.f32 %v209, %v401
    %v456 = vadd.f32 %v214, %v406
    %v457 = vadd.f32 %v217, %v409
    %v458 = vadd.f32 %v222, %v414
    %v459 = vadd.f32 %v225, %v417
    %v460 = vadd.f32 %v230, %v422
    %v461 = vadd.f32 %v233, %v425
    %v462 = vadd.f32 %v238, %v430
    %v463 = vadd.f32 %v241, %v433
    %v464 = vadd.f32 %v246, %v438
    %v465 = vadd.f32 %v249, %v441
    %v466 = vadd.f32 %v254, %v446
    %v467 = vadd.f32 %v257, %v449
    %468 = vadd.xlane.f32.xlu0 %v452
    %v469 = vpop.xlane.xlu0 %468
    %470 = vadd.xlane.f32.xlu0 %v453
    %v471 = vpop.xlane.xlu0 %470
    %472 = vadd.xlane.f32.xlu0 %v454
    %v473 = vpop.xlane.xlu0 %472
    %474 = vadd.xlane.f32.xlu0 %v455
    %v475 = vpop.xlane.xlu0 %474
    %476 = vadd.xlane.f32.xlu0 %v456
    %v477 = vpop.xlane.xlu0 %476
    %478 = vadd.xlane.f32.xlu0 %v457
    %v479 = vpop.xlane.xlu0 %478
    %480 = vadd.xlane.f32.xlu0 %v458
    %v481 = vpop.xlane.xlu0 %480
    %482 = vadd.xlane.f32.xlu0 %v459
    %v483 = vpop.xlane.xlu0 %482
    %484 = vadd.xlane.f32.xlu0 %v460
    %v485 = vpop.xlane.xlu0 %484
    %486 = vadd.xlane.f32.xlu0 %v461
    %v487 = vpop.xlane.xlu0 %486
    %488 = vadd.xlane.f32.xlu0 %v462
    %v489 = vpop.xlane.xlu0 %488
    %490 = vadd.xlane.f32.xlu0 %v463
    %v491 = vpop.xlane.xlu0 %490
    %492 = vadd.xlane.f32.xlu0 %v464
    %v493 = vpop.xlane.xlu0 %492
    %494 = vadd.xlane.f32.xlu0 %v465
    %v495 = vpop.xlane.xlu0 %494
    %496 = vadd.xlane.f32.xlu0 %v466
    %v497 = vpop.xlane.xlu0 %496
    %498 = vadd.xlane.f32.xlu0 %v467
    %v499 = vpop.xlane.xlu0 %498
    %v500 = vmul.f32 %v469, 0.03125
    %v501 = vmul.f32 %v471, 0.03125
    %v502 = vmul.f32 %v473, 0.03125
    %v503 = vmul.f32 %v475, 0.03125
    %v504 = vmul.f32 %v477, 0.03125
    %v505 = vmul.f32 %v479, 0.03125
    %v506 = vmul.f32 %v481, 0.03125
    %v507 = vmul.f32 %v483, 0.03125
    %v508 = vmul.f32 %v485, 0.03125
    %v509 = vmul.f32 %v487, 0.03125
    %v510 = vmul.f32 %v489, 0.03125
    %v511 = vmul.f32 %v491, 0.03125
    %v512 = vmul.f32 %v493, 0.03125
    %v513 = vmul.f32 %v495, 0.03125
    %v514 = vmul.f32 %v497, 0.03125
    %v515 = vmul.f32 %v499, 0.03125
    %v516 = vsub.f32 %v452, %v500
    %v517 = vsub.f32 %v453, %v501
    %v518 = vsub.f32 %v454, %v502
    %v519 = vsub.f32 %v455, %v503
    %v520 = vsub.f32 %v456, %v504
    %v521 = vsub.f32 %v457, %v505
    %v522 = vsub.f32 %v458, %v506
    %v523 = vsub.f32 %v459, %v507
    %v524 = vsub.f32 %v460, %v508
    %v525 = vsub.f32 %v461, %v509
    %v526 = vsub.f32 %v462, %v510
    %v527 = vsub.f32 %v463, %v511
    %v528 = vsub.f32 %v464, %v512
    %v529 = vsub.f32 %v465, %v513
    %v530 = vsub.f32 %v466, %v514
    %v531 = vsub.f32 %v467, %v515
    %v532 = vlaneseq
    %v533 = vand.u32 %v532, 127
    %vm534 = vcmp.lt.s32.totalorder %v533, 32
    %v535 = vsel %vm534, %v516, 0.0
    %v536 = vsel %vm534, %v517, 0.0
    %v537 = vsel %vm534, %v518, 0.0
    %v538 = vsel %vm534, %v519, 0.0
    %v539 = vsel %vm534, %v520, 0.0
    %v540 = vsel %vm534, %v521, 0.0
    %v541 = vsel %vm534, %v522, 0.0
    %v542 = vsel %vm534, %v523, 0.0
    %v543 = vsel %vm534, %v524, 0.0
    %v544 = vsel %vm534, %v525, 0.0
    %v545 = vsel %vm534, %v526, 0.0
    %v546 = vsel %vm534, %v527, 0.0
    %v547 = vsel %vm534, %v528, 0.0
    %v548 = vsel %vm534, %v529, 0.0
    %v549 = vsel %vm534, %v530, 0.0
    %v550 = vsel %vm534, %v531, 0.0
    %v551 = vmul.f32 %v535, %v535
    %v552 = vmul.f32 %v536, %v536
    %v553 = vmul.f32 %v537, %v537
    %v554 = vmul.f32 %v538, %v538
    %v555 = vmul.f32 %v539, %v539
    %v556 = vmul.f32 %v540, %v540
    %v557 = vmul.f32 %v541, %v541
    %v558 = vmul.f32 %v542, %v542
    %v559 = vmul.f32 %v543, %v543
    %v560 = vmul.f32 %v544, %v544
    %v561 = vmul.f32 %v545, %v545
    %v562 = vmul.f32 %v546, %v546
    %v563 = vmul.f32 %v547, %v547
    %v564 = vmul.f32 %v548, %v548
    %v565 = vmul.f32 %v549, %v549
    %v566 = vmul.f32 %v550, %v550
    %567 = vadd.xlane.f32.xlu0 %v551
    %v568 = vpop.xlane.xlu0 %567
    %569 = vadd.xlane.f32.xlu0 %v552
    %v570 = vpop.xlane.xlu0 %569
    %571 = vadd.xlane.f32.xlu0 %v553
    %v572 = vpop.xlane.xlu0 %571
    %573 = vadd.xlane.f32.xlu0 %v554
    %v574 = vpop.xlane.xlu0 %573
    %575 = vadd.xlane.f32.xlu0 %v555
    %v576 = vpop.xlane.xlu0 %575
    %577 = vadd.xlane.f32.xlu0 %v556
    %v578 = vpop.xlane.xlu0 %577
    %579 = vadd.xlane.f32.xlu0 %v557
    %v580 = vpop.xlane.xlu0 %579
    %581 = vadd.xlane.f32.xlu0 %v558
    %v582 = vpop.xlane.xlu0 %581
    %583 = vadd.xlane.f32.xlu0 %v559
    %v584 = vpop.xlane.xlu0 %583
    %585 = vadd.xlane.f32.xlu0 %v560
    %v586 = vpop.xlane.xlu0 %585
    %587 = vadd.xlane.f32.xlu0 %v561
    %v588 = vpop.xlane.xlu0 %587
    %589 = vadd.xlane.f32.xlu0 %v562
    %v590 = vpop.xlane.xlu0 %589
    %591 = vadd.xlane.f32.xlu0 %v563
    %v592 = vpop.xlane.xlu0 %591
    %593 = vadd.xlane.f32.xlu0 %v564
    %v594 = vpop.xlane.xlu0 %593
    %595 = vadd.xlane.f32.xlu0 %v565
    %v596 = vpop.xlane.xlu0 %595
    %597 = vadd.xlane.f32.xlu0 %v566
    %v598 = vpop.xlane.xlu0 %597
    %v599 = vmul.f32 %v568, 0.03125
    %v600 = vmul.f32 %v570, 0.03125
    %v601 = vmul.f32 %v572, 0.03125
    %v602 = vmul.f32 %v574, 0.03125
    %v603 = vmul.f32 %v576, 0.03125
    %v604 = vmul.f32 %v578, 0.03125
    %v605 = vmul.f32 %v580, 0.03125
    %v606 = vmul.f32 %v582, 0.03125
    %v607 = vmul.f32 %v584, 0.03125
    %v608 = vmul.f32 %v586, 0.03125
    %v609 = vmul.f32 %v588, 0.03125
    %v610 = vmul.f32 %v590, 0.03125
    %v611 = vmul.f32 %v592, 0.03125
    %v612 = vmul.f32 %v594, 0.03125
    %v613 = vmul.f32 %v596, 0.03125
    %v614 = vmul.f32 %v598, 0.03125
    %v615 = vadd.f32 %v599, 1e-05
    %v616 = vadd.f32 %v600, 1e-05
    %v617 = vadd.f32 %v601, 1e-05
    %v618 = vadd.f32 %v602, 1e-05
    %v619 = vadd.f32 %v603, 1e-05
    %v620 = vadd.f32 %v604, 1e-05
    %v621 = vadd.f32 %v605, 1e-05
    %v622 = vadd.f32 %v606, 1e-05
    %v623 = vadd.f32 %v607, 1e-05
    %v624 = vadd.f32 %v608, 1e-05
    %v625 = vadd.f32 %v609, 1e-05
    %v626 = vadd.f32 %v610, 1e-05
    %v627 = vadd.f32 %v611, 1e-05
    %v628 = vadd.f32 %v612, 1e-05
    %v629 = vadd.f32 %v613, 1e-05
    %v630 = vadd.f32 %v614, 1e-05
    %v631 = vrsqrt.pop %v615
    %v632 = vrsqrt.pop %v616
    %v633 = vrsqrt.pop %v617
    %v634 = vrsqrt.pop %v618
    %v635 = vrsqrt.pop %v619
    %v636 = vrsqrt.pop %v620
    %v637 = vrsqrt.pop %v621
    %v638 = vrsqrt.pop %v622
    %v639 = vrsqrt.pop %v623
    %v640 = vrsqrt.pop %v624
    %v641 = vrsqrt.pop %v625
    %v642 = vrsqrt.pop %v626
    %v643 = vrsqrt.pop %v627
    %v644 = vrsqrt.pop %v628
    %v645 = vrsqrt.pop %v629
    %v646 = vrsqrt.pop %v630
    %v647 = vmul.f32 %v535, %v631
    %v648 = vmul.f32 %v536, %v632
    %v649 = vmul.f32 %v537, %v633
    %v650 = vmul.f32 %v538, %v634
    %v651 = vmul.f32 %v539, %v635
    %v652 = vmul.f32 %v540, %v636
    %v653 = vmul.f32 %v541, %v637
    %v654 = vmul.f32 %v542, %v638
    %v655 = vmul.f32 %v543, %v639
    %v656 = vmul.f32 %v544, %v640
    %v657 = vmul.f32 %v545, %v641
    %v658 = vmul.f32 %v546, %v642
    %v659 = vmul.f32 %v547, %v643
    %v660 = vmul.f32 %v548, %v644
    %v661 = vmul.f32 %v549, %v645
    %v662 = vmul.f32 %v550, %v646
    %v663 = vld [vmem:[%s5] sm:$0x1]
    %v665 = vlaneseq
    %v666 = vshrl.u32 %v665, 7
    %v667 = vsub.s32 0, %v666
    %v668 = vrot.slane %v663, %v667
    %v670 = vmul.f32 %v647, %v668
    %v671 = vmul.f32 %v648, %v668
    %v672 = vmul.f32 %v649, %v668
    %v673 = vmul.f32 %v650, %v668
    %v674 = vmul.f32 %v651, %v668
    %v675 = vmul.f32 %v652, %v668
    %v676 = vmul.f32 %v653, %v668
    %v677 = vmul.f32 %v654, %v668
    %v678 = vmul.f32 %v655, %v668
    %v679 = vmul.f32 %v656, %v668
    %v680 = vmul.f32 %v657, %v668
    %v681 = vmul.f32 %v658, %v668
    %v682 = vmul.f32 %v659, %v668
    %v683 = vmul.f32 %v660, %v668
    %v684 = vmul.f32 %v661, %v668
    %v685 = vmul.f32 %v662, %v668
    %v686 = vld [vmem:[%s6] sm:$0x1]
    %v688 = vlaneseq
    %v689 = vshrl.u32 %v688, 7
    %v690 = vsub.s32 0, %v689
    %v691 = vrot.slane %v686, %v690
    %v693 = vadd.f32 %v670, %v691
    %v694 = vadd.f32 %v671, %v691
    %v695 = vadd.f32 %v672, %v691
    %v696 = vadd.f32 %v673, %v691
    %v697 = vadd.f32 %v674, %v691
    %v698 = vadd.f32 %v675, %v691
    %v699 = vadd.f32 %v676, %v691
    %v700 = vadd.f32 %v677, %v691
    %v701 = vadd.f32 %v678, %v691
    %v702 = vadd.f32 %v679, %v691
    %v703 = vadd.f32 %v680, %v691
    %v704 = vadd.f32 %v681, %v691
    %v705 = vadd.f32 %v682, %v691
    %v706 = vadd.f32 %v683, %v691
    %v707 = vadd.f32 %v684, %v691
    %v708 = vadd.f32 %v685, %v691
    %vm709 = vcmask 261120
    %710 = vst.msk [vmem:[#allocation2] sm:$0xff] %vm709, %v693
    %711 = vst.msk [vmem:[#allocation2 + $0x8] sm:$0xff] %vm709, %v694
    %712 = vst.msk [vmem:[#allocation2 + $0x10] sm:$0xff] %vm709, %v695
    %713 = vst.msk [vmem:[#allocation2 + $0x18] sm:$0xff] %vm709, %v696
    %714 = vst.msk [vmem:[#allocation2 + $0x20] sm:$0xff] %vm709, %v697
    %715 = vst.msk [vmem:[#allocation2 + $0x28] sm:$0xff] %vm709, %v698
    %716 = vst.msk [vmem:[#allocation2 + $0x30] sm:$0xff] %vm709, %v699
    %717 = vst.msk [vmem:[#allocation2 + $0x38] sm:$0xff] %vm709, %v700
    %718 = vst.msk [vmem:[#allocation2 + $0x40] sm:$0xff] %vm709, %v701
    %719 = vst.msk [vmem:[#allocation2 + $0x48] sm:$0xff] %vm709, %v702
    %720 = vst.msk [vmem:[#allocation2 + $0x50] sm:$0xff] %vm709, %v703
    %721 = vst.msk [vmem:[#allocation2 + $0x58] sm:$0xff] %vm709, %v704
    %722 = vst.msk [vmem:[#allocation2 + $0x60] sm:$0xff] %vm709, %v705
    %723 = vst.msk [vmem:[#allocation2 + $0x68] sm:$0xff] %vm709, %v706
    %724 = vst.msk [vmem:[#allocation2 + $0x70] sm:$0xff] %vm709, %v707
    %725 = vst.msk [vmem:[#allocation2 + $0x78] sm:$0xff] %vm709, %v708
    // Predicated region
    $region30: #{_feed_forward_impl.1} parent=1 // pred_check
      _
    $region31: #{_feed_forward_impl.1} parent=1 // pred_check_branch
      %727 = sbr.rel (0) target = $region33
    $region32: #{_feed_forward_impl.1} parent=1 // pred_region
      %s729 = ssub.s32 2048, 256
      %730 = vsyncadd [#allocation3], %s729
      %s731 = sshll.u32 [#allocation2], 4
      %s732 = int_to_ptr.vmem [resolvable:$true] %s731
      %737 = dma.vmem_to_hbm [thread:$0]  %s732, 256, %s7, [#allocation3], 128, 128, 8
    $region33: #{_feed_forward_impl.1} parent=1 // pred_fallthru
      _
    // Predicated region
    $region34: #{_feed_forward_impl.1} parent=1 // pred_check
      _
    $region35: #{_feed_forward_impl.1} parent=1 // pred_check_branch
      %739 = sbr.rel (0) target = $region37
    $region36: #{_feed_forward_impl.1} parent=1 // pred_region
      %740 = dma.done [#allocation3], 2048
    $region37: #{_feed_forward_impl.1} parent=1 // pred_fallthru
      _
    %741 = vsyncpa [#allocation3], 1

// kernel: _feed_forward_impl.1
$region0: #{_feed_forward_impl.1}
  #allocation0 [shape = 'u32[]', space=smem, size = 0x4, offset = 0x4, fixed_abs, tag = 'smem constant byte address 0x4 - core index']
  #allocation1 [shape = 'u32[144,128]{1,0:T(1,128)}', space=vmem, size = 0x12000, scoped, tag = 'internal scratch']
  %s0 = inlined_call_operand.vmem [shape: bf16[16,128], index: 0, kind: input, shape index: {}]
  %s1 = inlined_call_operand.vmem [shape: bf16[128,128], index: 1, kind: input, shape index: {}]
  %s2 = inlined_call_operand.vmem [shape: f32[1,128], index: 2, kind: input, shape index: {}]
  %s3 = inlined_call_operand.vmem [shape: bf16[128,128], index: 3, kind: input, shape index: {}]
  %s4 = inlined_call_operand.vmem [shape: f32[1,128], index: 4, kind: input, shape index: {}]
  %s5 = inlined_call_operand.vmem [shape: f32[1,128], index: 5, kind: input, shape index: {}]
  %s6 = inlined_call_operand.vmem [shape: f32[1,128], index: 6, kind: input, shape index: {}]
  %s7 = inlined_call_operand.hbm [shape: f32[16,32], index: 7, kind: output, shape index: {}]
  %s8 = sld [smem:[#allocation0]]
  $region38: #{_feed_forward_impl.1} parent=0
    _
  %s10 = ssub.s32 1, %s8
  %s11 = scalar_select 0, %s10, %s8
  $region1: #{_feed_forward_impl.1} parent=0
    #allocation2 [shape = 'u8[65536]{0}', space=vmem, size = 0x10000, scoped, tag = 'output window, operand 0, single buffered']
    #allocation3 [shape = 's32[1]{0}', space=sflag, size = 0x4, scoped, tag = 'scoped memory for _feed_forward_impl.1']
    %12 = vsyncpa [#allocation3], 0
    // Predicated region
    $region2: #{_feed_forward_impl.1} parent=1 // pred_check
      _
    $region3: #{_feed_forward_impl.1} parent=1 // pred_check_branch
      %14 = sbr.rel (0) target = $region5
    $region4: #{_feed_forward_impl.1} parent=1 // pred_region
      _
    $region5: #{_feed_forward_impl.1} parent=1 // pred_fallthru
      _
    // Predicated region
    $region6: #{_feed_forward_impl.1} parent=1 // pred_check
      _
    $region7: #{_feed_forward_impl.1} parent=1 // pred_check_branch
      %16 = sbr.rel (0) target = $region9
    $region8: #{_feed_forward_impl.1} parent=1 // pred_region
      _
    $region9: #{_feed_forward_impl.1} parent=1 // pred_fallthru
      _
    // Predicated region
    $region10: #{_feed_forward_impl.1} parent=1 // pred_check
      _
    $region11: #{_feed_forward_impl.1} parent=1 // pred_check_branch
      %18 = sbr.rel (0) target = $region13
    $region12: #{_feed_forward_impl.1} parent=1 // pred_region
      _
    $region13: #{_feed_forward_impl.1} parent=1 // pred_fallthru
      _
    // Predicated region
    $region14: #{_feed_forward_impl.1} parent=1 // pred_check
      _
    $region15: #{_feed_forward_impl.1} parent=1 // pred_check_branch
      %20 = sbr.rel (0) target = $region17
    $region16: #{_feed_forward_impl.1} parent=1 // pred_region
      _
    $region17: #{_feed_forward_impl.1} parent=1 // pred_fallthru
      _
    // Predicated region
    $region18: #{_feed_forward_impl.1} parent=1 // pred_check
      _
    $region19: #{_feed_forward_impl.1} parent=1 // pred_check_branch
      %22 = sbr.rel (0) target = $region21
    $region20: #{_feed_forward_impl.1} parent=1 // pred_region
      _
    $region21: #{_feed_forward_impl.1} parent=1 // pred_fallthru
      _
    // Predicated region
    $region22: #{_feed_forward_impl.1} parent=1 // pred_check
      _
    $region23: #{_feed_forward_impl.1} parent=1 // pred_check_branch
      %24 = sbr.rel (0) target = $region25
    $region24: #{_feed_forward_impl.1} parent=1 // pred_region
      _
    $region25: #{_feed_forward_impl.1} parent=1 // pred_fallthru
      _
    // Predicated region
    $region26: #{_feed_forward_impl.1} parent=1 // pred_check
      _
    $region27: #{_feed_forward_impl.1} parent=1 // pred_check_branch
      %26 = sbr.rel (0) target = $region29
    $region28: #{_feed_forward_impl.1} parent=1 // pred_region
      _
    $region29: #{_feed_forward_impl.1} parent=1 // pred_fallthru
      _
    %v28 = vld [vmem:[%s0] sm:$0xf]
    %v29 = vld [vmem:[%s0 + $0x4] sm:$0xf]
    %v30 = vld [vmem:[%s0 + $0x8] sm:$0xf]
    %v31 = vld [vmem:[%s0 + $0xc] sm:$0xf]
    %v32 = vld [vmem:[%s0 + $0x10] sm:$0xf]
    %v33 = vld [vmem:[%s0 + $0x14] sm:$0xf]
    %v34 = vld [vmem:[%s0 + $0x18] sm:$0xf]
    %v35 = vld [vmem:[%s0 + $0x1c] sm:$0xf]
    %v36 = vld [vmem:[%s0 + $0x20] sm:$0xf]
    %v37 = vld [vmem:[%s0 + $0x24] sm:$0xf]
    %v38 = vld [vmem:[%s0 + $0x28] sm:$0xf]
    %v39 = vld [vmem:[%s0 + $0x2c] sm:$0xf]
    %v40 = vld [vmem:[%s0 + $0x30] sm:$0xf]
    %v41 = vld [vmem:[%s0 + $0x34] sm:$0xf]
    %v42 = vld [vmem:[%s0 + $0x38] sm:$0xf]
    %v43 = vld [vmem:[%s0 + $0x3c] sm:$0xf]
    %v44 = vld [vmem:[%s1] sm:$0xf]
    %v45 = vld [vmem:[%s1 + $0x4] sm:$0xf]
    %v46 = vld [vmem:[%s1 + $0x8] sm:$0xf]
    %v47 = vld [vmem:[%s1 + $0xc] sm:$0xf]
    %v48 = vld [vmem:[%s1 + $0x10] sm:$0xf]
    %v49 = vld [vmem:[%s1 + $0x14] sm:$0xf]
    %v50 = vld [vmem:[%s1 + $0x18] sm:$0xf]
    %v51 = vld [vmem:[%s1 + $0x1c] sm:$0xf]
    %v52 = vld [vmem:[%s1 + $0x20] sm:$0xf]
    %v53 = vld [vmem:[%s1 + $0x24] sm:$0xf]
    %v54 = vld [vmem:[%s1 + $0x28] sm:$0xf]
    %v55 = vld [vmem:[%s1 + $0x2c] sm:$0xf]
    %v56 = vld [vmem:[%s1 + $0x30] sm:$0xf]
    %v57 = vld [vmem:[%s1 + $0x34] sm:$0xf]
    %v58 = vld [vmem:[%s1 + $0x38] sm:$0xf]
    %v59 = vld [vmem:[%s1 + $0x3c] sm:$0xf]
    %v60 = vld [vmem:[%s2] sm:$0x1]
    %v62 = vlaneseq
    %v63 = vshrl.u32 %v62, 7
    %v64 = vsub.s32 0, %v63
    %v65 = vrot.slane %v60, %v64
    %v83 = vunpack.c.l.b16 %v28
    %v84 = vunpack.c.l.b16 %v29
    %v85 = vunpack.c.l.b16 %v30
    %v86 = vunpack.c.l.b16 %v31
    %v87 = vunpack.c.l.b16 %v32
    %v88 = vunpack.c.l.b16 %v33
    %v89 = vunpack.c.l.b16 %v34
    %v90 = vunpack.c.l.b16 %v35
    %v91 = vunpack.c.l.b16 %v36
    %v92 = vunpack.c.l.b16 %v37
    %v93 = vunpack.c.l.b16 %v38
    %v94 = vunpack.c.l.b16 %v39
    %v95 = vunpack.c.l.b16 %v40
    %v96 = vunpack.c.l.b16 %v41
    %v97 = vunpack.c.l.b16 %v42
    %v98 = vunpack.c.l.b16 %v43
    %v99 = vpack.c.b16 %v84, %v83
    %v100 = vpack.c.b16 %v86, %v85
    %v101 = vpack.c.b16 %v88, %v87
    %v102 = vpack.c.b16 %v90, %v89
    %v103 = vpack.c.b16 %v92, %v91
    %v104 = vpack.c.b16 %v94, %v93
    %v105 = vpack.c.b16 %v96, %v95
    %v106 = vpack.c.b16 %v98, %v97
    %v131 = vunpack.c.l.b16 %v44
    %v132 = vunpack.c.l.b16 %v45
    %v133 = vunpack.c.l.b16 %v46
    %v134 = vunpack.c.l.b16 %v47
    %v135 = vunpack.c.l.b16 %v48
    %v136 = vunpack.c.l.b16 %v49
    %v137 = vunpack.c.l.b16 %v50
    %v138 = vunpack.c.l.b16 %v51
    %v139 = vunpack.c.l.b16 %v52
    %v140 = vunpack.c.l.b16 %v53
    %v141 = vunpack.c.l.b16 %v54
    %v142 = vunpack.c.l.b16 %v55
    %v143 = vunpack.c.l.b16 %v56
    %v144 = vunpack.c.l.b16 %v57
    %v145 = vunpack.c.l.b16 %v58
    %v146 = vunpack.c.l.b16 %v59
    %v147 = vpack.c.b16 %v132, %v131
    %v148 = vpack.c.b16 %v134, %v133
    %v149 = vpack.c.b16 %v136, %v135
    %v150 = vpack.c.b16 %v138, %v137
    %v151 = vpack.c.b16 %v140, %v139
    %v152 = vpack.c.b16 %v142, %v141
    %v153 = vpack.c.b16 %v144, %v143
    %v154 = vpack.c.b16 %v146, %v145
    %163 = vmatprep.subr.bf16.mxu0 0
    %164 = vmatpush1.bf16.msra.mxu0 %v147
    %165 = vmatprep.subr.bf16.mxu0 0
    %166 = vmatpush1.bf16.msra.mxu0 %v148
    %167 = vmatprep.subr.bf16.mxu0 0
    %168 = vmatpush1.bf16.msra.mxu0 %v149
    %169 = vmatprep.subr.bf16.mxu0 0
    %170 = vmatpush1.bf16.msra.mxu0 %v150
    %171 = vmatprep.subr.bf16.mxu0 0
    %172 = vmatpush1.bf16.msra.mxu0 %v151
    %173 = vmatprep.subr.bf16.mxu0 0
    %174 = vmatpush1.bf16.msra.mxu0 %v152
    %175 = vmatprep.subr.bf16.mxu0 0
    %176 = vmatpush1.bf16.msra.mxu0 %v153
    %177 = vmatprep.subr.bf16.mxu0 0
    %178 = vmatpush1.bf16.msra.mxu0 %v154
    %179 = vmatprep.subr.bf16.mxu0 0
    %180 = vmatpush1.bf16.msra.mxu0 0
    %181 = vmatprep.subr.bf16.mxu0 0
    %182 = vmatpush1.bf16.msra.mxu0 0
    %183 = vmatprep.subr.bf16.mxu0 0
    %184 = vmatpush1.bf16.msra.mxu0 0
    %185 = vmatprep.subr.bf16.mxu0 0
    %186 = vmatpush1.bf16.msra.mxu0 0
    %187 = vmatprep.subr.bf16.mxu0 0
    %188 = vmatpush1.bf16.msra.mxu0 0
    %189 = vmatprep.subr.bf16.mxu0 0
    %190 = vmatpush1.bf16.msra.mxu0 0
    %191 = vmatprep.subr.bf16.mxu0 0
    %192 = vmatpush1.bf16.msra.mxu0 0
    %193 = vmatprep.subr.bf16.mxu0 0
    %194 = vmatpush1.bf16.msra.mxu0 0
    %195 = vmatprep.mubr.bf16.mxu0 0
    %196 = vmatmul.mubr.bf16.gmra.mrb[0].mxu0 %v99
    %v197 = vpop.f32.mrb[0].mxu0
    %v198 = vadd.f32 %v65, %v197
    %v199 = vpop.f32.mrb[0].mxu0
    %v200 = vpop.f32.mrb[0].mxu0
    %v201 = vadd.f32 %v65, %v200
    %v202 = vpop.f32.mrb[0].mxu0
    %203 = vmatprep.mubr.bf16.mxu0 0
    %204 = vmatmul.mubr.bf16.gmra.mrb[0].mxu0 %v100
    %v205 = vpop.f32.mrb[0].mxu0
    %v206 = vadd.f32 %v65, %v205
    %v207 = vpop.f32.mrb[0].mxu0
    %v208 = vpop.f32.mrb[0].mxu0
    %v209 = vadd.f32 %v65, %v208
    %v210 = vpop.f32.mrb[0].mxu0
    %211 = vmatprep.mubr.bf16.mxu0 0
    %212 = vmatmul.mubr.bf16.gmra.mrb[0].mxu0 %v101
    %v213 = vpop.f32.mrb[0].mxu0
    %v214 = vadd.f32 %v65, %v213
    %v215 = vpop.f32.mrb[0].mxu0
    %v216 = vpop.f32.mrb[0].mxu0
    %v217 = vadd.f32 %v65, %v216
    %v218 = vpop.f32.mrb[0].mxu0
    %219 = vmatprep.mubr.bf16.mxu0 0
    %220 = vmatmul.mubr.bf16.gmra.mrb[0].mxu0 %v102
    %v221 = vpop.f32.mrb[0].mxu0
    %v222 = vadd.f32 %v65, %v221
    %v223 = vpop.f32.mrb[0].mxu0
    %v224 = vpop.f32.mrb[0].mxu0
    %v225 = vadd.f32 %v65, %v224
    %v226 = vpop.f32.mrb[0].mxu0
    %227 = vmatprep.mubr.bf16.mxu0 0
    %228 = vmatmul.mubr.bf16.gmra.mrb[0].mxu0 %v103
    %v229 = vpop.f32.mrb[0].mxu0
    %v230 = vadd.f32 %v65, %v229
    %v231 = vpop.f32.mrb[0].mxu0
    %v232 = vpop.f32.mrb[0].mxu0
    %v233 = vadd.f32 %v65, %v232
    %v234 = vpop.f32.mrb[0].mxu0
    %235 = vmatprep.mubr.bf16.mxu0 0
    %236 = vmatmul.mubr.bf16.gmra.mrb[0].mxu0 %v104
    %v237 = vpop.f32.mrb[0].mxu0
    %v238 = vadd.f32 %v65, %v237
    %v239 = vpop.f32.mrb[0].mxu0
    %v240 = vpop.f32.mrb[0].mxu0
    %v241 = vadd.f32 %v65, %v240
    %v242 = vpop.f32.mrb[0].mxu0
    %243 = vmatprep.mubr.bf16.mxu0 0
    %244 = vmatmul.mubr.bf16.gmra.mrb[0].mxu0 %v105
    %v245 = vpop.f32.mrb[0].mxu0
    %v246 = vadd.f32 %v65, %v245
    %v247 = vpop.f32.mrb[0].mxu0
    %v248 = vpop.f32.mrb[0].mxu0
    %v249 = vadd.f32 %v65, %v248
    %v250 = vpop.f32.mrb[0].mxu0
    %251 = vmatprep.mubr.bf16.mxu0 0
    %252 = vmatmul.mubr.bf16.gmra.mrb[0].mxu0 %v106
    %v253 = vpop.f32.mrb[0].mxu0
    %v254 = vadd.f32 %v65, %v253
    %v255 = vpop.f32.mrb[0].mxu0
    %v256 = vpop.f32.mrb[0].mxu0
    %v257 = vadd.f32 %v65, %v256
    %v258 = vpop.f32.mrb[0].mxu0
    %259 = vdwg.mxu0
    %v260 = vmax.f32 %v198, 0.0
    %v261 = vmax.f32 %v201, 0.0
    %v262 = vmax.f32 %v206, 0.0
    %v263 = vmax.f32 %v209, 0.0
    %v264 = vmax.f32 %v214, 0.0
    %v265 = vmax.f32 %v217, 0.0
    %v266 = vmax.f32 %v222, 0.0
    %v267 = vmax.f32 %v225, 0.0
    %v268 = vmax.f32 %v230, 0.0
    %v269 = vmax.f32 %v233, 0.0
    %v270 = vmax.f32 %v238, 0.0
    %v271 = vmax.f32 %v241, 0.0
    %v272 = vmax.f32 %v246, 0.0
    %v273 = vmax.f32 %v249, 0.0
    %v274 = vmax.f32 %v254, 0.0
    %v275 = vmax.f32 %v257, 0.0
    %v276 = vpack.c.bf16 %v261, %v260
    %v277 = vpack.c.bf16 %v263, %v262
    %v278 = vpack.c.bf16 %v265, %v264
    %v279 = vpack.c.bf16 %v267, %v266
    %v280 = vpack.c.bf16 %v269, %v268
    %v281 = vpack.c.bf16 %v271, %v270
    %v282 = vpack.c.bf16 %v273, %v272
    %v283 = vpack.c.bf16 %v275, %v274
    %v284 = vld [vmem:[%s3] sm:$0xf]
    %v285 = vld [vmem:[%s3 + $0x4] sm:$0xf]
    %v286 = vld [vmem:[%s3 + $0x8] sm:$0xf]
    %v287 = vld [vmem:[%s3 + $0xc] sm:$0xf]
    %v288 = vld [vmem:[%s3 + $0x10] sm:$0xf]
    %v289 = vld [vmem:[%s3 + $0x14] sm:$0xf]
    %v290 = vld [vmem:[%s3 + $0x18] sm:$0xf]
    %v291 = vld [vmem:[%s3 + $0x1c] sm:$0xf]
    %v292 = vld [vmem:[%s3 + $0x20] sm:$0xf]
    %v293 = vld [vmem:[%s3 + $0x24] sm:$0xf]
    %v294 = vld [vmem:[%s3 + $0x28] sm:$0xf]
    %v295 = vld [vmem:[%s3 + $0x2c] sm:$0xf]
    %v296 = vld [vmem:[%s3 + $0x30] sm:$0xf]
    %v297 = vld [vmem:[%s3 + $0x34] sm:$0xf]
    %v298 = vld [vmem:[%s3 + $0x38] sm:$0xf]
    %v299 = vld [vmem:[%s3 + $0x3c] sm:$0xf]
    %v300 = vld [vmem:[%s4] sm:$0x1]
    %v302 = vlaneseq
    %v303 = vshrl.u32 %v302, 7
    %v304 = vsub.s32 0, %v303
    %v305 = vrot.slane %v300, %v304
    %v323 = vunpack.c.l.b16 %v284
    %v324 = vunpack.c.l.b16 %v285
    %v325 = vunpack.c.l.b16 %v286
    %v326 = vunpack.c.l.b16 %v287
    %v327 = vunpack.c.l.b16 %v288
    %v328 = vunpack.c.l.b16 %v289
    %v329 = vunpack.c.l.b16 %v290
    %v330 = vunpack.c.l.b16 %v291
    %v331 = vunpack.c.l.b16 %v292
    %v332 = vunpack.c.l.b16 %v293
    %v333 = vunpack.c.l.b16 %v294
    %v334 = vunpack.c.l.b16 %v295
    %v335 = vunpack.c.l.b16 %v296
    %v336 = vunpack.c.l.b16 %v297
    %v337 = vunpack.c.l.b16 %v298
    %v338 = vunpack.c.l.b16 %v299
    %v339 = vpack.c.b16 %v324, %v323
    %v340 = vpack.c.b16 %v326, %v325
    %v341 = vpack.c.b16 %v328, %v327
    %v342 = vpack.c.b16 %v330, %v329
    %v343 = vpack.c.b16 %v332, %v331
    %v344 = vpack.c.b16 %v334, %v333
    %v345 = vpack.c.b16 %v336, %v335
    %v346 = vpack.c.b16 %v338, %v337
    %355 = vmatprep.subr.bf16.mxu0 0
    %356 = vmatpush1.bf16.msra.mxu0 %v339
    %357 = vmatprep.subr.bf16.mxu0 0
    %358 = vmatpush1.bf16.msra.mxu0 %v340
    %359 = vmatprep.subr.bf16.mxu0 0
    %360 = vmatpush1.bf16.msra.mxu0 %v341
    %361 = vmatprep.subr.bf16.mxu0 0
    %362 = vmatpush1.bf16.msra.mxu0 %v342
    %363 = vmatprep.subr.bf16.mxu0 0
    %364 = vmatpush1.bf16.msra.mxu0 %v343
    %365 = vmatprep.subr.bf16.mxu0 0
    %366 = vmatpush1.bf16.msra.mxu0 %v344
    %367 = vmatprep.subr.bf16.mxu0 0
    %368 = vmatpush1.bf16.msra.mxu0 %v345
    %369 = vmatprep.subr.bf16.mxu0 0
    %370 = vmatpush1.bf16.msra.mxu0 %v346
    %371 = vmatprep.subr.bf16.mxu0 0
    %372 = vmatpush1.bf16.msra.mxu0 0
    %373 = vmatprep.subr.bf16.mxu0 0
    %374 = vmatpush1.bf16.msra.mxu0 0
    %375 = vmatprep.subr.bf16.mxu0 0
    %376 = vmatpush1.bf16.msra.mxu0 0
    %377 = vmatprep.subr.bf16.mxu0 0
    %378 = vmatpush1.bf16.msra.mxu0 0
    %379 = vmatprep.subr.bf16.mxu0 0
    %380 = vmatpush1.bf16.msra.mxu0 0
    %381 = vmatprep.subr.bf16.mxu0 0
    %382 = vmatpush1.bf16.msra.mxu0 0
    %383 = vmatprep.subr.bf16.mxu0 0
    %384 = vmatpush1.bf16.msra.mxu0 0
    %385 = vmatprep.subr.bf16.mxu0 0
    %386 = vmatpush1.bf16.msra.mxu0 0
    %387 = vmatprep.mubr.bf16.mxu0 0
    %388 = vmatmul.mubr.bf16.gmra.mrb[0].mxu0 %v276
    %v389 = vpop.f32.mrb[0].mxu0
    %v390 = vadd.f32 %v305, %v389
    %v391 = vpop.f32.mrb[0].mxu0
    %v392 = vpop.f32.mrb[0].mxu0
    %v393 = vadd.f32 %v305, %v392
    %v394 = vpop.f32.mrb[0].mxu0
    %395 = vmatprep.mubr.bf16.mxu0 0
    %396 = vmatmul.mubr.bf16.gmra.mrb[0].mxu0 %v277
    %v397 = vpop.f32.mrb[0].mxu0
    %v398 = vadd.f32 %v305, %v397
    %v399 = vpop.f32.mrb[0].mxu0
    %v400 = vpop.f32.mrb[0].mxu0
    %v401 = vadd.f32 %v305, %v400
    %v402 = vpop.f32.mrb[0].mxu0
    %403 = vmatprep.mubr.bf16.mxu0 0
    %404 = vmatmul.mubr.bf16.gmra.mrb[0].mxu0 %v278
    %v405 = vpop.f32.mrb[0].mxu0
    %v406 = vadd.f32 %v305, %v405
    %v407 = vpop.f32.mrb[0].mxu0
    %v408 = vpop.f32.mrb[0].mxu0
    %v409 = vadd.f32 %v305, %v408
    %v410 = vpop.f32.mrb[0].mxu0
    %411 = vmatprep.mubr.bf16.mxu0 0
    %412 = vmatmul.mubr.bf16.gmra.mrb[0].mxu0 %v279
    %v413 = vpop.f32.mrb[0].mxu0
    %v414 = vadd.f32 %v305, %v413
    %v415 = vpop.f32.mrb[0].mxu0
    %v416 = vpop.f32.mrb[0].mxu0
    %v417 = vadd.f32 %v305, %v416
    %v418 = vpop.f32.mrb[0].mxu0
    %419 = vmatprep.mubr.bf16.mxu0 0
    %420 = vmatmul.mubr.bf16.gmra.mrb[0].mxu0 %v280
    %v421 = vpop.f32.mrb[0].mxu0
    %v422 = vadd.f32 %v305, %v421
    %v423 = vpop.f32.mrb[0].mxu0
    %v424 = vpop.f32.mrb[0].mxu0
    %v425 = vadd.f32 %v305, %v424
    %v426 = vpop.f32.mrb[0].mxu0
    %427 = vmatprep.mubr.bf16.mxu0 0
    %428 = vmatmul.mubr.bf16.gmra.mrb[0].mxu0 %v281
    %v429 = vpop.f32.mrb[0].mxu0
    %v430 = vadd.f32 %v305, %v429
    %v431 = vpop.f32.mrb[0].mxu0
    %v432 = vpop.f32.mrb[0].mxu0
    %v433 = vadd.f32 %v305, %v432
    %v434 = vpop.f32.mrb[0].mxu0
    %435 = vmatprep.mubr.bf16.mxu0 0
    %436 = vmatmul.mubr.bf16.gmra.mrb[0].mxu0 %v282
    %v437 = vpop.f32.mrb[0].mxu0
    %v438 = vadd.f32 %v305, %v437
    %v439 = vpop.f32.mrb[0].mxu0
    %v440 = vpop.f32.mrb[0].mxu0
    %v441 = vadd.f32 %v305, %v440
    %v442 = vpop.f32.mrb[0].mxu0
    %443 = vmatprep.mubr.bf16.mxu0 0
    %444 = vmatmul.mubr.bf16.gmra.mrb[0].mxu0 %v283
    %v445 = vpop.f32.mrb[0].mxu0
    %v446 = vadd.f32 %v305, %v445
    %v447 = vpop.f32.mrb[0].mxu0
    %v448 = vpop.f32.mrb[0].mxu0
    %v449 = vadd.f32 %v305, %v448
    %v450 = vpop.f32.mrb[0].mxu0
    %451 = vdwg.mxu0
    %v452 = vadd.f32 %v198, %v390
    %v453 = vadd.f32 %v201, %v393
    %v454 = vadd.f32 %v206, %v398
    %v455 = vadd.f32 %v209, %v401
    %v456 = vadd.f32 %v214, %v406
    %v457 = vadd.f32 %v217, %v409
    %v458 = vadd.f32 %v222, %v414
    %v459 = vadd.f32 %v225, %v417
    %v460 = vadd.f32 %v230, %v422
    %v461 = vadd.f32 %v233, %v425
    %v462 = vadd.f32 %v238, %v430
    %v463 = vadd.f32 %v241, %v433
    %v464 = vadd.f32 %v246, %v438
    %v465 = vadd.f32 %v249, %v441
    %v466 = vadd.f32 %v254, %v446
    %v467 = vadd.f32 %v257, %v449
    %468 = vadd.xlane.f32.xlu0 %v452
    %v469 = vpop.xlane.xlu0 %468
    %470 = vadd.xlane.f32.xlu0 %v453
    %v471 = vpop.xlane.xlu0 %470
    %472 = vadd.xlane.f32.xlu0 %v454
    %v473 = vpop.xlane.xlu0 %472
    %474 = vadd.xlane.f32.xlu0 %v455
    %v475 = vpop.xlane.xlu0 %474
    %476 = vadd.xlane.f32.xlu0 %v456
    %v477 = vpop.xlane.xlu0 %476
    %478 = vadd.xlane.f32.xlu0 %v457
    %v479 = vpop.xlane.xlu0 %478
    %480 = vadd.xlane.f32.xlu0 %v458
    %v481 = vpop.xlane.xlu0 %480
    %482 = vadd.xlane.f32.xlu0 %v459
    %v483 = vpop.xlane.xlu0 %482
    %484 = vadd.xlane.f32.xlu0 %v460
    %v485 = vpop.xlane.xlu0 %484
    %486 = vadd.xlane.f32.xlu0 %v461
    %v487 = vpop.xlane.xlu0 %486
    %488 = vadd.xlane.f32.xlu0 %v462
    %v489 = vpop.xlane.xlu0 %488
    %490 = vadd.xlane.f32.xlu0 %v463
    %v491 = vpop.xlane.xlu0 %490
    %492 = vadd.xlane.f32.xlu0 %v464
    %v493 = vpop.xlane.xlu0 %492
    %494 = vadd.xlane.f32.xlu0 %v465
    %v495 = vpop.xlane.xlu0 %494
    %496 = vadd.xlane.f32.xlu0 %v466
    %v497 = vpop.xlane.xlu0 %496
    %498 = vadd.xlane.f32.xlu0 %v467
    %v499 = vpop.xlane.xlu0 %498
    %v500 = vmul.f32 %v469, 0.03125
    %v501 = vmul.f32 %v471, 0.03125
    %v502 = vmul.f32 %v473, 0.03125
    %v503 = vmul.f32 %v475, 0.03125
    %v504 = vmul.f32 %v477, 0.03125
    %v505 = vmul.f32 %v479, 0.03125
    %v506 = vmul.f32 %v481, 0.03125
    %v507 = vmul.f32 %v483, 0.03125
    %v508 = vmul.f32 %v485, 0.03125
    %v509 = vmul.f32 %v487, 0.03125
    %v510 = vmul.f32 %v489, 0.03125
    %v511 = vmul.f32 %v491, 0.03125
    %v512 = vmul.f32 %v493, 0.03125
    %v513 = vmul.f32 %v495, 0.03125
    %v514 = vmul.f32 %v497, 0.03125
    %v515 = vmul.f32 %v499, 0.03125
    %v516 = vsub.f32 %v452, %v500
    %v517 = vsub.f32 %v453, %v501
    %v518 = vsub.f32 %v454, %v502
    %v519 = vsub.f32 %v455, %v503
    %v520 = vsub.f32 %v456, %v504
    %v521 = vsub.f32 %v457, %v505
    %v522 = vsub.f32 %v458, %v506
    %v523 = vsub.f32 %v459, %v507
    %v524 = vsub.f32 %v460, %v508
    %v525 = vsub.f32 %v461, %v509
    %v526 = vsub.f32 %v462, %v510
    %v527 = vsub.f32 %v463, %v511
    %v528 = vsub.f32 %v464, %v512
    %v529 = vsub.f32 %v465, %v513
    %v530 = vsub.f32 %v466, %v514
    %v531 = vsub.f32 %v467, %v515
    %v532 = vlaneseq
    %v533 = vand.u32 %v532, 127
    %vm534 = vcmp.lt.s32.totalorder %v533, 32
    %v535 = vsel %vm534, %v516, 0.0
    %v536 = vsel %vm534, %v517, 0.0
    %v537 = vsel %vm534, %v518, 0.0
    %v538 = vsel %vm534, %v519, 0.0
    %v539 = vsel %vm534, %v520, 0.0
    %v540 = vsel %vm534, %v521, 0.0
    %v541 = vsel %vm534, %v522, 0.0
    %v542 = vsel %vm534, %v523, 0.0
    %v543 = vsel %vm534, %v524, 0.0
    %v544 = vsel %vm534, %v525, 0.0
    %v545 = vsel %vm534, %v526, 0.0
    %v546 = vsel %vm534, %v527, 0.0
    %v547 = vsel %vm534, %v528, 0.0
    %v548 = vsel %vm534, %v529, 0.0
    %v549 = vsel %vm534, %v530, 0.0
    %v550 = vsel %vm534, %v531, 0.0
    %v551 = vmul.f32 %v535, %v535
    %v552 = vmul.f32 %v536, %v536
    %v553 = vmul.f32 %v537, %v537
    %v554 = vmul.f32 %v538, %v538
    %v555 = vmul.f32 %v539, %v539
    %v556 = vmul.f32 %v540, %v540
    %v557 = vmul.f32 %v541, %v541
    %v558 = vmul.f32 %v542, %v542
    %v559 = vmul.f32 %v543, %v543
    %v560 = vmul.f32 %v544, %v544
    %v561 = vmul.f32 %v545, %v545
    %v562 = vmul.f32 %v546, %v546
    %v563 = vmul.f32 %v547, %v547
    %v564 = vmul.f32 %v548, %v548
    %v565 = vmul.f32 %v549, %v549
    %v566 = vmul.f32 %v550, %v550
    %567 = vadd.xlane.f32.xlu0 %v551
    %v568 = vpop.xlane.xlu0 %567
    %569 = vadd.xlane.f32.xlu0 %v552
    %v570 = vpop.xlane.xlu0 %569
    %571 = vadd.xlane.f32.xlu0 %v553
    %v572 = vpop.xlane.xlu0 %571
    %573 = vadd.xlane.f32.xlu0 %v554
    %v574 = vpop.xlane.xlu0 %573
    %575 = vadd.xlane.f32.xlu0 %v555
    %v576 = vpop.xlane.xlu0 %575
    %577 = vadd.xlane.f32.xlu0 %v556
    %v578 = vpop.xlane.xlu0 %577
    %579 = vadd.xlane.f32.xlu0 %v557
    %v580 = vpop.xlane.xlu0 %579
    %581 = vadd.xlane.f32.xlu0 %v558
    %v582 = vpop.xlane.xlu0 %581
    %583 = vadd.xlane.f32.xlu0 %v559
    %v584 = vpop.xlane.xlu0 %583
    %585 = vadd.xlane.f32.xlu0 %v560
    %v586 = vpop.xlane.xlu0 %585
    %587 = vadd.xlane.f32.xlu0 %v561
    %v588 = vpop.xlane.xlu0 %587
    %589 = vadd.xlane.f32.xlu0 %v562
    %v590 = vpop.xlane.xlu0 %589
    %591 = vadd.xlane.f32.xlu0 %v563
    %v592 = vpop.xlane.xlu0 %591
    %593 = vadd.xlane.f32.xlu0 %v564
    %v594 = vpop.xlane.xlu0 %593
    %595 = vadd.xlane.f32.xlu0 %v565
    %v596 = vpop.xlane.xlu0 %595
    %597 = vadd.xlane.f32.xlu0 %v566
    %v598 = vpop.xlane.xlu0 %597
    %v599 = vmul.f32 %v568, 0.03125
    %v600 = vmul.f32 %v570, 0.03125
    %v601 = vmul.f32 %v572, 0.03125
    %v602 = vmul.f32 %v574, 0.03125
    %v603 = vmul.f32 %v576, 0.03125
    %v604 = vmul.f32 %v578, 0.03125
    %v605 = vmul.f32 %v580, 0.03125
    %v606 = vmul.f32 %v582, 0.03125
    %v607 = vmul.f32 %v584, 0.03125
    %v608 = vmul.f32 %v586, 0.03125
    %v609 = vmul.f32 %v588, 0.03125
    %v610 = vmul.f32 %v590, 0.03125
    %v611 = vmul.f32 %v592, 0.03125
    %v612 = vmul.f32 %v594, 0.03125
    %v613 = vmul.f32 %v596, 0.03125
    %v614 = vmul.f32 %v598, 0.03125
    %v615 = vadd.f32 %v599, 1e-05
    %v616 = vadd.f32 %v600, 1e-05
    %v617 = vadd.f32 %v601, 1e-05
    %v618 = vadd.f32 %v602, 1e-05
    %v619 = vadd.f32 %v603, 1e-05
    %v620 = vadd.f32 %v604, 1e-05
    %v621 = vadd.f32 %v605, 1e-05
    %v622 = vadd.f32 %v606, 1e-05
    %v623 = vadd.f32 %v607, 1e-05
    %v624 = vadd.f32 %v608, 1e-05
    %v625 = vadd.f32 %v609, 1e-05
    %v626 = vadd.f32 %v610, 1e-05
    %v627 = vadd.f32 %v611, 1e-05
    %v628 = vadd.f32 %v612, 1e-05
    %v629 = vadd.f32 %v613, 1e-05
    %v630 = vadd.f32 %v614, 1e-05
    %v631 = vrsqrt.pop %v615
    %v632 = vrsqrt.pop %v616
    %v633 = vrsqrt.pop %v617
    %v634 = vrsqrt.pop %v618
    %v635 = vrsqrt.pop %v619
    %v636 = vrsqrt.pop %v620
    %v637 = vrsqrt.pop %v621
    %v638 = vrsqrt.pop %v622
    %v639 = vrsqrt.pop %v623
    %v640 = vrsqrt.pop %v624
    %v641 = vrsqrt.pop %v625
    %v642 = vrsqrt.pop %v626
    %v643 = vrsqrt.pop %v627
    %v644 = vrsqrt.pop %v628
    %v645 = vrsqrt.pop %v629
    %v646 = vrsqrt.pop %v630
    %v647 = vmul.f32 %v535, %v631
    %v648 = vmul.f32 %v536, %v632
    %v649 = vmul.f32 %v537, %v633
    %v650 = vmul.f32 %v538, %v634
    %v651 = vmul.f32 %v539, %v635
    %v652 = vmul.f32 %v540, %v636
    %v653 = vmul.f32 %v541, %v637
    %v654 = vmul.f32 %v542, %v638
    %v655 = vmul.f32 %v543, %v639
    %v656 = vmul.f32 %v544, %v640
    %v657 = vmul.f32 %v545, %v641
    %v658 = vmul.f32 %v546, %v642
    %v659 = vmul.f32 %v547, %v643
    %v660 = vmul.f32 %v548, %v644
    %v661 = vmul.f32 %v549, %v645
    %v662 = vmul.f32 %v550, %v646
    %v663 = vld [vmem:[%s5] sm:$0x1]
    %v665 = vlaneseq
    %v666 = vshrl.u32 %v665, 7
    %v667 = vsub.s32 0, %v666
    %v668 = vrot.slane %v663, %v667
    %v670 = vmul.f32 %v647, %v668
    %v671 = vmul.f32 %v648, %v668
    %v672 = vmul.f32 %v649, %v668
    %v673 = vmul.f32 %v650, %v668
    %v674 = vmul.f32 %v651, %v668
    %v675 = vmul.f32 %v652, %v668
    %v676 = vmul.f32 %v653, %v668
    %v677 = vmul.f32 %v654, %v668
    %v678 = vmul.f32 %v655, %v668
    %v679 = vmul.f32 %v656, %v668
    %v680 = vmul.f32 %v657, %v668
    %v681 = vmul.f32 %v658, %v668
    %v682 = vmul.f32 %v659, %v668
    %v683 = vmul.f32 %v660, %v668
    %v684 = vmul.f32 %v661, %v668
    %v685 = vmul.f32 %v662, %v668
    %v686 = vld [vmem:[%s6] sm:$0x1]
    %v688 = vlaneseq
    %v689 = vshrl.u32 %v688, 7
    %v690 = vsub.s32 0, %v689
    %v691 = vrot.slane %v686, %v690
    %v693 = vadd.f32 %v670, %v691
    %v694 = vadd.f32 %v671, %v691
    %v695 = vadd.f32 %v672, %v691
    %v696 = vadd.f32 %v673, %v691
    %v697 = vadd.f32 %v674, %v691
    %v698 = vadd.f32 %v675, %v691
    %v699 = vadd.f32 %v676, %v691
    %v700 = vadd.f32 %v677, %v691
    %v701 = vadd.f32 %v678, %v691
    %v702 = vadd.f32 %v679, %v691
    %v703 = vadd.f32 %v680, %v691
    %v704 = vadd.f32 %v681, %v691
    %v705 = vadd.f32 %v682, %v691
    %v706 = vadd.f32 %v683, %v691
    %v707 = vadd.f32 %v684, %v691
    %v708 = vadd.f32 %v685, %v691
    %vm709 = vcmask 261120
    %710 = vst.msk [vmem:[#allocation2] sm:$0xff] %vm709, %v693
    %711 = vst.msk [vmem:[#allocation2 + $0x8] sm:$0xff] %vm709, %v694
    %712 = vst.msk [vmem:[#allocation2 + $0x10] sm:$0xff] %vm709, %v695
    %713 = vst.msk [vmem:[#allocation2 + $0x18] sm:$0xff] %vm709, %v696
    %714 = vst.msk [vmem:[#allocation2 + $0x20] sm:$0xff] %vm709, %v697
    %715 = vst.msk [vmem:[#allocation2 + $0x28] sm:$0xff] %vm709, %v698
    %716 = vst.msk [vmem:[#allocation2 + $0x30] sm:$0xff] %vm709, %v699
    %717 = vst.msk [vmem:[#allocation2 + $0x38] sm:$0xff] %vm709, %v700
    %718 = vst.msk [vmem:[#allocation2 + $0x40] sm:$0xff] %vm709, %v701
    %719 = vst.msk [vmem:[#allocation2 + $0x48] sm:$0xff] %vm709, %v702
    %720 = vst.msk [vmem:[#allocation2 + $0x50] sm:$0xff] %vm709, %v703
    %721 = vst.msk [vmem:[#allocation2 + $0x58] sm:$0xff] %vm709, %v704
    %722 = vst.msk [vmem:[#allocation2 + $0x60] sm:$0xff] %vm709, %v705
    %723 = vst.msk [vmem:[#allocation2 + $0x68] sm:$0xff] %vm709, %v706
    %724 = vst.msk [vmem:[#allocation2 + $0x70] sm:$0xff] %vm709, %v707
    %725 = vst.msk [vmem:[#allocation2 + $0x78] sm:$0xff] %vm709, %v708
    // Predicated region
    $region30: #{_feed_forward_impl.1} parent=1 // pred_check
      _
    $region31: #{_feed_forward_impl.1} parent=1 // pred_check_branch
      %727 = sbr.rel (0) target = $region33
    $region32: #{_feed_forward_impl.1} parent=1 // pred_region
      %s729 = ssub.s32 2048, 256
      %730 = vsyncadd [#allocation3], %s729
      %s731 = sshll.u32 [#allocation2], 4
      %s732 = int_to_ptr.vmem [resolvable:$true] %s731
      %737 = dma.vmem_to_hbm [thread:$0]  %s732, 256, %s7, [#allocation3], 128, 128, 8
    $region33: #{_feed_forward_impl.1} parent=1 // pred_fallthru
      _
    // Predicated region
    $region34: #{_feed_forward_impl.1} parent=1 // pred_check
      _
    $region35: #{_feed_forward_impl.1} parent=1 // pred_check_branch
      %739 = sbr.rel (0) target = $region37
    $region36: #{_feed_forward_impl.1} parent=1 // pred_region
      %740 = dma.done [#allocation3], 2048
    $region37: #{_feed_forward_impl.1} parent=1 // pred_fallthru
      _
    %741 = vsyncpa [#allocation3], 1

</llo_original>
